<compile_context>
chip_gen: v6e
topology: v6e:2x2x1
jax: 0.10.0
libtpu: 0.0.40
codegen_flags: <defaults>
</compile_context>

<pallas_src>
import functools

import jax
import jax.numpy as jnp
from jax.experimental import pallas as pl
from jax.experimental.pallas import tpu as pltpu

BN_EPS = 1e-5
LANE = 128


def _round_up(x, m):
    return (x + m - 1) // m * m


def _fold_bn(gamma, beta, mean, var):
    scale = gamma * jax.lax.rsqrt(var + BN_EPS)
    bias = beta - mean * scale
    return scale.astype(jnp.float32), bias.astype(jnp.float32)


def _choose_tile_h(Ho, S, K, W_in, Wo, Cp_in, Cp_out,
                   budget_bytes=16 * 1024 * 1024):
    """Largest output-row tile whose double-buffered blocks fit the budget."""
    best = 1
    for th in range(1, Ho + 1):
        th_in = th * S + K - 1
        need = (2 * th_in * W_in * Cp_in * 2      # double-buffered bf16 input tile
                + 2 * th * Wo * Cp_out * 4        # double-buffered f32 output tile
                + th * Wo * Cp_out * 4)           # f32 accumulator
        if need <= budget_bytes:
            best = th
    if Ho > 1:
        # keep >= 2 H-tiles so the grid pipelines and shards across v7x cores
        best = min(best, pl.cdiv(Ho, 2))
    return max(best, 1)


def _baseconv_kernel(x_ref, w_ref, b_ref, o_ref, *, K, S, TH, Wo):
    # x_ref : (TH*S + K - 1, Wo*S + K - 1, Cp_in)   bf16 halo'd input slab
    # w_ref : (K*K, Cp_in, Cp_out)                  bf16, BN scale folded in
    # b_ref : (1, Cp_out)                           f32 folded BN bias
    # o_ref : (TH*Wo, Cp_out)                       output (lane-dense)
    cin = x_ref.shape[-1]
    acc = None
    for kh in range(K):
        for kw in range(K):
            patch = x_ref[kh:kh + TH * S, kw:kw + Wo * S, :]
            if S > 1:
                # contiguous slice + reshape split instead of a strided gather
                patch = patch.reshape(TH, S, Wo, S, cin)[:, 0, :, 0, :]
            tap = jnp.dot(patch.reshape(TH * Wo, cin), w_ref[kh * K + kw],
                          preferred_element_type=jnp.float32)
            acc = tap if acc is None else acc + tap
    y = acc + b_ref[...]          # folded BN bias (f32)
    y = y * jax.nn.sigmoid(y)     # SiLU in f32
    o_ref[...] = y.astype(o_ref.dtype)


def baseconv_forward(x_nchw, params, *, ksize, conv_stride):
    """BaseConv forward (eval BN). x_nchw: (N, C_in, H, W) as in PyTorch."""
    K, S = ksize, conv_stride
    pad = (K - 1) // 2
    N, C, H, W = x_nchw.shape
    Cout = params["w"].shape[0]

    Ho = (H + 2 * pad - K) // S + 1
    Wo = (W + 2 * pad - K) // S + 1

    Cp_in = _round_up(C, LANE)
    Cp_out = _round_up(Cout, LANE)
    W_in = Wo * S + K - 1

    TH = _choose_tile_h(Ho, S, K, W_in, Wo, Cp_in, Cp_out)
    n_th = pl.cdiv(Ho, TH)
    Ho_pad = n_th * TH
    TH_in = TH * S + K - 1
    H_need = Ho_pad * S + K - 1

    # ---- fold BN into weights / bias (host side) ----
    s, b = _fold_bn(params["bn_gamma"], params["bn_beta"],
                    params["bn_mean"], params["bn_var"])
    # (Cout, Cin, K, K) -> (K*K, Cin, Cout), scale columns by BN scale
    w_k = jnp.transpose(params["w"].astype(jnp.float32), (2, 3, 1, 0))
    w_k = w_k.reshape(K * K, C, Cout) * s[None, None, :]
    w_k = jnp.pad(w_k, ((0, 0), (0, Cp_in - C), (0, Cp_out - Cout)))
    w_k = w_k.astype(jnp.bfloat16)
    bias = jnp.pad(b, (0, Cp_out - Cout)).reshape(1, Cp_out).astype(jnp.float32)

    # ---- NCHW -> NHWC, spatial zero-pad, channel pad, bf16, halo'd H-tiles ----
    x_nhwc = jnp.transpose(x_nchw, (0, 2, 3, 1)).astype(jnp.float32)
    pad_bottom = H_need - pad - H
    pad_right = W_in - pad - W
    xp = jnp.pad(x_nhwc, ((0, 0), (pad, pad_bottom), (pad, pad_right),
                          (0, Cp_in - C))).astype(jnp.bfloat16)
    x_tiles = jnp.stack(
        [jax.lax.slice_in_dim(xp, t * TH * S, t * TH * S + TH_in, axis=1)
         for t in range(n_th)], axis=1)        # (N, n_th, TH_in, W_in, Cp_in)

    kernel = functools.partial(_baseconv_kernel, K=K, S=S, TH=TH, Wo=Wo)

    flops = 2 * N * Ho_pad * Wo * K * K * Cp_in * Cp_out
    bytes_accessed = (x_tiles.size * 2 + w_k.size * 2 + bias.size * 4
                      + N * Ho_pad * Wo * Cp_out * 4)
    cost = pl.CostEstimate(flops=flops,
                           transcendentals=N * Ho_pad * Wo * Cp_out,
                           bytes_accessed=bytes_accessed)

    out_tiled = pl.pallas_call(
        kernel,
        out_shape=jax.ShapeDtypeStruct((N, n_th, TH * Wo, Cp_out),
                                       x_nchw.dtype),
        grid_spec=pltpu.PrefetchScalarGridSpec(
            num_scalar_prefetch=0,
            grid=(N, n_th),
            in_specs=[
                pl.BlockSpec((None, None, TH_in, W_in, Cp_in),
                             lambda n, t: (n, t, 0, 0, 0)),
                pl.BlockSpec((K * K, Cp_in, Cp_out), lambda n, t: (0, 0, 0)),
                pl.BlockSpec((1, Cp_out), lambda n, t: (0, 0)),
            ],
            out_specs=pl.BlockSpec((None, None, TH * Wo, Cp_out),
                                   lambda n, t: (n, t, 0, 0)),
        ),
        compiler_params=pltpu.CompilerParams(
            dimension_semantics=("parallel", "parallel"),
            vmem_limit_bytes=48 * 1024 * 1024),
        cost_estimate=cost,
    )(x_tiles, w_k, bias)

    out = out_tiled.reshape(N, Ho_pad, Wo, Cp_out)[:, :Ho, :, :Cout]
    return jnp.transpose(out, (0, 3, 1, 2))


def _reference_forward(x_nchw, params, *, ksize, conv_stride):
    """Pure-JAX reference with the same bf16 input/weight quantization."""
    K, S = ksize, conv_stride
    pad = (K - 1) // 2
    N, C, H, W = x_nchw.shape
    Cout = params["w"].shape[0]

    s, b = _fold_bn(params["bn_gamma"], params["bn_beta"],
                    params["bn_mean"], params["bn_var"])
    x = jnp.transpose(x_nchw, (0, 2, 3, 1)).astype(jnp.bfloat16)
    # (Cout, Cin, K, K) -> HWIO, BN scale folded, bf16 like the kernel
    w_hwio = (jnp.transpose(params["w"].astype(jnp.float32), (2, 3, 1, 0))
              * s[None, None, None, :]).astype(jnp.bfloat16)
    y = jax.lax.conv_general_dilated(
        x, w_hwio, window_strides=(S, S),
        padding=((pad, pad), (pad, pad)),
        dimension_numbers=("NHWC", "HWIO", "NHWC"),
        preferred_element_type=jnp.float32)
    y = y + b.reshape(1, 1, 1, Cout)
    y = y * jax.nn.sigmoid(y)
    return jnp.transpose(y, (0, 3, 1, 2)).astype(x_nchw.dtype)


def make_params(key, in_channels, out_channels, ksize):
    """Deterministic synthetic parameters matching BaseConv.__init__ shapes."""
    ks = jax.random.split(key, 6)
    C, Cout, K = in_channels, out_channels, ksize
    return {
        # Conv2d weight, PyTorch layout (Cout, Cin, K, K); bias=False
        "w": jax.random.normal(ks[0], (Cout, C, K, K), jnp.float32) * 0.2,
        "bn_gamma": 1.0 + 0.1 * jax.random.normal(ks[1], (Cout,), jnp.float32),
        "bn_beta": 0.1 * jax.random.normal(ks[2], (Cout,), jnp.float32),
        "bn_mean": 0.05 * jax.random.normal(ks[3], (Cout,), jnp.float32),
        "bn_var": jnp.abs(jax.random.normal(ks[4], (Cout,), jnp.float32)) + 0.5,
    }


if __name__ == "__main__":
    key = jax.random.PRNGKey(0)
    k_x, k_p = jax.random.split(key)

    N, C_in, H, W = 2, 4, 16, 16
    C_out, K, S = 8, 3, 1
    pad = (K - 1) // 2
    Ho = (H + 2 * pad - K) // S + 1
    Wo = (W + 2 * pad - K) // S + 1

    x = jax.random.normal(k_x, (N, C_in, H, W), jnp.float32)
    params = make_params(k_p, C_in, C_out, K)

    out = jax.block_until_ready(
        baseconv_forward(x, params, ksize=K, conv_stride=S))
    ref = jax.block_until_ready(
        _reference_forward(x, params, ksize=K, conv_stride=S))

    assert out.shape == (N, C_out, Ho, Wo), out.shape
    max_err = float(jnp.max(jnp.abs(out - ref)))
    assert jnp.allclose(out, ref, atol=1e-3, rtol=1e-3), max_err

    print("KERNEL_OK")
</pallas_src>

<mosaic_0001>
module attributes {stable_mosaic.version = 11 : i64} {
  func.func @_baseconv_kernel(%arg0: i32, %arg1: i32, %arg2: memref<1x1x10x18x128xbf16, #tpu.memory_space<vmem>>, %arg3: memref<9x128x128xbf16, #tpu.memory_space<vmem>>, %arg4: memref<1x128xf32, #tpu.memory_space<vmem>>, %arg5: memref<1x1x128x128xf32, #tpu.memory_space<vmem>>) attributes {dimension_semantics = [#tpu.dimension_semantics<parallel>, #tpu.dimension_semantics<parallel>], iteration_bounds = array<i64: 2, 2>, scalar_prefetch = 0 : i64, scratch_operands = 0 : i64, tpu.core_type = #tpu.core_type<tc>, window_params = [{transform_indices = @transform_0, window_bounds = array<i64: 1, 1, 10, 18, 128>}, {pipeline_mode = #tpu.pipeline_mode<synchronous>, transform_indices = @transform_1, window_bounds = array<i64: 9, 128, 128>}, {pipeline_mode = #tpu.pipeline_mode<synchronous>, transform_indices = @transform_2, window_bounds = array<i64: 1, 128>}, {transform_indices = @transform_3, window_bounds = array<i64: 1, 1, 128, 128>}]} {
    %c0 = arith.constant 0 : index
    %c0_0 = arith.constant 0 : index
    %c0_1 = arith.constant 0 : index
    %c0_2 = arith.constant 0 : index
    %c0_3 = arith.constant 0 : index
    %0 = vector.load %arg2[%c0, %c0_0, %c0_1, %c0_2, %c0_3] : memref<1x1x10x18x128xbf16, #tpu.memory_space<vmem>>, vector<1x1x8x16x128xbf16>
    %1 = vector.shape_cast %0 : vector<1x1x8x16x128xbf16> to vector<8x16x128xbf16>
    %2 = vector.shape_cast %1 : vector<8x16x128xbf16> to vector<128x128xbf16>
    %c0_4 = arith.constant 0 : index
    %c0_5 = arith.constant 0 : index
    %c0_6 = arith.constant 0 : index
    %3 = vector.load %arg3[%c0_4, %c0_5, %c0_6] : memref<9x128x128xbf16, #tpu.memory_space<vmem>>, vector<1x128x128xbf16>
    %4 = vector.shape_cast %3 : vector<1x128x128xbf16> to vector<128x128xbf16>
    %cst = arith.constant dense<0.000000e+00> : vector<128x128xf32>
    %5 = tpu.matmul %2, %4, %cst {dimension_numbers = #tpu.dot_dimension_numbers<[1], [0], [0], [1], [0, 0, 1, 1], [], []>} : vector<128x128xbf16>, vector<128x128xbf16>, vector<128x128xf32> -> vector<128x128xf32>
    %c0_7 = arith.constant 0 : index
    %c0_8 = arith.constant 0 : index
    %c0_9 = arith.constant 0 : index
    %c1 = arith.constant 1 : index
    %c0_10 = arith.constant 0 : index
    %6 = vector.load %arg2[%c0_7, %c0_8, %c0_9, %c1, %c0_10] : memref<1x1x10x18x128xbf16, #tpu.memory_space<vmem>>, vector<1x1x8x16x128xbf16>
    %7 = vector.shape_cast %6 : vector<1x1x8x16x128xbf16> to vector<8x16x128xbf16>
    %8 = vector.shape_cast %7 : vector<8x16x128xbf16> to vector<128x128xbf16>
    %c1_11 = arith.constant 1 : index
    %c0_12 = arith.constant 0 : index
    %c0_13 = arith.constant 0 : index
    %9 = vector.load %arg3[%c1_11, %c0_12, %c0_13] : memref<9x128x128xbf16, #tpu.memory_space<vmem>>, vector<1x128x128xbf16>
    %10 = vector.shape_cast %9 : vector<1x128x128xbf16> to vector<128x128xbf16>
    %cst_14 = arith.constant dense<0.000000e+00> : vector<128x128xf32>
    %11 = tpu.matmul %8, %10, %cst_14 {dimension_numbers = #tpu.dot_dimension_numbers<[1], [0], [0], [1], [0, 0, 1, 1], [], []>} : vector<128x128xbf16>, vector<128x128xbf16>, vector<128x128xf32> -> vector<128x128xf32>
    %12 = arith.addf %5, %11 : vector<128x128xf32>
    %c0_15 = arith.constant 0 : index
    %c0_16 = arith.constant 0 : index
    %c0_17 = arith.constant 0 : index
    %c2 = arith.constant 2 : index
    %c0_18 = arith.constant 0 : index
    %13 = vector.load %arg2[%c0_15, %c0_16, %c0_17, %c2, %c0_18] : memref<1x1x10x18x128xbf16, #tpu.memory_space<vmem>>, vector<1x1x8x16x128xbf16>
    %14 = vector.shape_cast %13 : vector<1x1x8x16x128xbf16> to vector<8x16x128xbf16>
    %15 = vector.shape_cast %14 : vector<8x16x128xbf16> to vector<128x128xbf16>
    %c2_19 = arith.constant 2 : index
    %c0_20 = arith.constant 0 : index
    %c0_21 = arith.constant 0 : index
    %16 = vector.load %arg3[%c2_19, %c0_20, %c0_21] : memref<9x128x128xbf16, #tpu.memory_space<vmem>>, vector<1x128x128xbf16>
    %17 = vector.shape_cast %16 : vector<1x128x128xbf16> to vector<128x128xbf16>
    %cst_22 = arith.constant dense<0.000000e+00> : vector<128x128xf32>
    %18 = tpu.matmul %15, %17, %cst_22 {dimension_numbers = #tpu.dot_dimension_numbers<[1], [0], [0], [1], [0, 0, 1, 1], [], []>} : vector<128x128xbf16>, vector<128x128xbf16>, vector<128x128xf32> -> vector<128x128xf32>
    %19 = arith.addf %12, %18 : vector<128x128xf32>
    %c0_23 = arith.constant 0 : index
    %c0_24 = arith.constant 0 : index
    %c1_25 = arith.constant 1 : index
    %c0_26 = arith.constant 0 : index
    %c0_27 = arith.constant 0 : index
    %20 = vector.load %arg2[%c0_23, %c0_24, %c1_25, %c0_26, %c0_27] : memref<1x1x10x18x128xbf16, #tpu.memory_space<vmem>>, vector<1x1x8x16x128xbf16>
    %21 = vector.shape_cast %20 : vector<1x1x8x16x128xbf16> to vector<8x16x128xbf16>
    %22 = vector.shape_cast %21 : vector<8x16x128xbf16> to vector<128x128xbf16>
    %c3 = arith.constant 3 : index
    %c0_28 = arith.constant 0 : index
    %c0_29 = arith.constant 0 : index
    %23 = vector.load %arg3[%c3, %c0_28, %c0_29] : memref<9x128x128xbf16, #tpu.memory_space<vmem>>, vector<1x128x128xbf16>
    %24 = vector.shape_cast %23 : vector<1x128x128xbf16> to vector<128x128xbf16>
    %cst_30 = arith.constant dense<0.000000e+00> : vector<128x128xf32>
    %25 = tpu.matmul %22, %24, %cst_30 {dimension_numbers = #tpu.dot_dimension_numbers<[1], [0], [0], [1], [0, 0, 1, 1], [], []>} : vector<128x128xbf16>, vector<128x128xbf16>, vector<128x128xf32> -> vector<128x128xf32>
    %26 = arith.addf %19, %25 : vector<128x128xf32>
    %c0_31 = arith.constant 0 : index
    %c0_32 = arith.constant 0 : index
    %c1_33 = arith.constant 1 : index
    %c1_34 = arith.constant 1 : index
    %c0_35 = arith.constant 0 : index
    %27 = vector.load %arg2[%c0_31, %c0_32, %c1_33, %c1_34, %c0_35] : memref<1x1x10x18x128xbf16, #tpu.memory_space<vmem>>, vector<1x1x8x16x128xbf16>
    %28 = vector.shape_cast %27 : vector<1x1x8x16x128xbf16> to vector<8x16x128xbf16>
    %29 = vector.shape_cast %28 : vector<8x16x128xbf16> to vector<128x128xbf16>
    %c4 = arith.constant 4 : index
    %c0_36 = arith.constant 0 : index
    %c0_37 = arith.constant 0 : index
    %30 = vector.load %arg3[%c4, %c0_36, %c0_37] : memref<9x128x128xbf16, #tpu.memory_space<vmem>>, vector<1x128x128xbf16>
    %31 = vector.shape_cast %30 : vector<1x128x128xbf16> to vector<128x128xbf16>
    %cst_38 = arith.constant dense<0.000000e+00> : vector<128x128xf32>
    %32 = tpu.matmul %29, %31, %cst_38 {dimension_numbers = #tpu.dot_dimension_numbers<[1], [0], [0], [1], [0, 0, 1, 1], [], []>} : vector<128x128xbf16>, vector<128x128xbf16>, vector<128x128xf32> -> vector<128x128xf32>
    %33 = arith.addf %26, %32 : vector<128x128xf32>
    %c0_39 = arith.constant 0 : index
    %c0_40 = arith.constant 0 : index
    %c1_41 = arith.constant 1 : index
    %c2_42 = arith.constant 2 : index
    %c0_43 = arith.constant 0 : index
    %34 = vector.load %arg2[%c0_39, %c0_40, %c1_41, %c2_42, %c0_43] : memref<1x1x10x18x128xbf16, #tpu.memory_space<vmem>>, vector<1x1x8x16x128xbf16>
    %35 = vector.shape_cast %34 : vector<1x1x8x16x128xbf16> to vector<8x16x128xbf16>
    %36 = vector.shape_cast %35 : vector<8x16x128xbf16> to vector<128x128xbf16>
    %c5 = arith.constant 5 : index
    %c0_44 = arith.constant 0 : index
    %c0_45 = arith.constant 0 : index
    %37 = vector.load %arg3[%c5, %c0_44, %c0_45] : memref<9x128x128xbf16, #tpu.memory_space<vmem>>, vector<1x128x128xbf16>
    %38 = vector.shape_cast %37 : vector<1x128x128xbf16> to vector<128x128xbf16>
    %cst_46 = arith.constant dense<0.000000e+00> : vector<128x128xf32>
    %39 = tpu.matmul %36, %38, %cst_46 {dimension_numbers = #tpu.dot_dimension_numbers<[1], [0], [0], [1], [0, 0, 1, 1], [], []>} : vector<128x128xbf16>, vector<128x128xbf16>, vector<128x128xf32> -> vector<128x128xf32>
    %40 = arith.addf %33, %39 : vector<128x128xf32>
    %c0_47 = arith.constant 0 : index
    %c0_48 = arith.constant 0 : index
    %c2_49 = arith.constant 2 : index
    %c0_50 = arith.constant 0 : index
    %c0_51 = arith.constant 0 : index
    %41 = vector.load %arg2[%c0_47, %c0_48, %c2_49, %c0_50, %c0_51] : memref<1x1x10x18x128xbf16, #tpu.memory_space<vmem>>, vector<1x1x8x16x128xbf16>
    %42 = vector.shape_cast %41 : vector<1x1x8x16x128xbf16> to vector<8x16x128xbf16>
    %43 = vector.shape_cast %42 : vector<8x16x128xbf16> to vector<128x128xbf16>
    %c6 = arith.constant 6 : index
    %c0_52 = arith.constant 0 : index
    %c0_53 = arith.constant 0 : index
    %44 = vector.load %arg3[%c6, %c0_52, %c0_53] : memref<9x128x128xbf16, #tpu.memory_space<vmem>>, vector<1x128x128xbf16>
    %45 = vector.shape_cast %44 : vector<1x128x128xbf16> to vector<128x128xbf16>
    %cst_54 = arith.constant dense<0.000000e+00> : vector<128x128xf32>
    %46 = tpu.matmul %43, %45, %cst_54 {dimension_numbers = #tpu.dot_dimension_numbers<[1], [0], [0], [1], [0, 0, 1, 1], [], []>} : vector<128x128xbf16>, vector<128x128xbf16>, vector<128x128xf32> -> vector<128x128xf32>
    %47 = arith.addf %40, %46 : vector<128x128xf32>
    %c0_55 = arith.constant 0 : index
    %c0_56 = arith.constant 0 : index
    %c2_57 = arith.constant 2 : index
    %c1_58 = arith.constant 1 : index
    %c0_59 = arith.constant 0 : index
    %48 = vector.load %arg2[%c0_55, %c0_56, %c2_57, %c1_58, %c0_59] : memref<1x1x10x18x128xbf16, #tpu.memory_space<vmem>>, vector<1x1x8x16x128xbf16>
    %49 = vector.shape_cast %48 : vector<1x1x8x16x128xbf16> to vector<8x16x128xbf16>
    %50 = vector.shape_cast %49 : vector<8x16x128xbf16> to vector<128x128xbf16>
    %c7 = arith.constant 7 : index
    %c0_60 = arith.constant 0 : index
    %c0_61 = arith.constant 0 : index
    %51 = vector.load %arg3[%c7, %c0_60, %c0_61] : memref<9x128x128xbf16, #tpu.memory_space<vmem>>, vector<1x128x128xbf16>
    %52 = vector.shape_cast %51 : vector<1x128x128xbf16> to vector<128x128xbf16>
    %cst_62 = arith.constant dense<0.000000e+00> : vector<128x128xf32>
    %53 = tpu.matmul %50, %52, %cst_62 {dimension_numbers = #tpu.dot_dimension_numbers<[1], [0], [0], [1], [0, 0, 1, 1], [], []>} : vector<128x128xbf16>, vector<128x128xbf16>, vector<128x128xf32> -> vector<128x128xf32>
    %54 = arith.addf %47, %53 : vector<128x128xf32>
    %c0_63 = arith.constant 0 : index
    %c0_64 = arith.constant 0 : index
    %c2_65 = arith.constant 2 : index
    %c2_66 = arith.constant 2 : index
    %c0_67 = arith.constant 0 : index
    %55 = vector.load %arg2[%c0_63, %c0_64, %c2_65, %c2_66, %c0_67] : memref<1x1x10x18x128xbf16, #tpu.memory_space<vmem>>, vector<1x1x8x16x128xbf16>
    %56 = vector.shape_cast %55 : vector<1x1x8x16x128xbf16> to vector<8x16x128xbf16>
    %57 = vector.shape_cast %56 : vector<8x16x128xbf16> to vector<128x128xbf16>
    %c8 = arith.constant 8 : index
    %c0_68 = arith.constant 0 : index
    %c0_69 = arith.constant 0 : index
    %58 = vector.load %arg3[%c8, %c0_68, %c0_69] : memref<9x128x128xbf16, #tpu.memory_space<vmem>>, vector<1x128x128xbf16>
    %59 = vector.shape_cast %58 : vector<1x128x128xbf16> to vector<128x128xbf16>
    %cst_70 = arith.constant dense<0.000000e+00> : vector<128x128xf32>
    %60 = tpu.matmul %57, %59, %cst_70 {dimension_numbers = #tpu.dot_dimension_numbers<[1], [0], [0], [1], [0, 0, 1, 1], [], []>} : vector<128x128xbf16>, vector<128x128xbf16>, vector<128x128xf32> -> vector<128x128xf32>
    %61 = arith.addf %54, %60 : vector<128x128xf32>
    %c0_71 = arith.constant 0 : index
    %c0_72 = arith.constant 0 : index
    %62 = vector.load %arg4[%c0_71, %c0_72] : memref<1x128xf32, #tpu.memory_space<vmem>>, vector<1x128xf32>
    %63 = vector.broadcast %62 : vector<1x128xf32> to vector<128x128xf32>
    %64 = arith.addf %61, %63 : vector<128x128xf32>
    %65 = arith.negf %64 : vector<128x128xf32>
    %66 = math.exp %65 : vector<128x128xf32>
    %cst_73 = arith.constant 1.000000e+00 : f32
    %67 = vector.broadcast %cst_73 : f32 to vector<128x128xf32>
    %68 = arith.addf %67, %66 : vector<128x128xf32>
    %69 = arith.divf %67, %68 : vector<128x128xf32>
    %70 = arith.mulf %64, %69 : vector<128x128xf32>
    %c0_74 = arith.constant 0 : index
    %c0_75 = arith.constant 0 : index
    %c0_76 = arith.constant 0 : index
    %c0_77 = arith.constant 0 : index
    %71 = vector.load %arg5[%c0_74, %c0_75, %c0_76, %c0_77] : memref<1x1x128x128xf32, #tpu.memory_space<vmem>>, vector<1x1x128x128xf32>
    %72 = vector.shape_cast %71 : vector<1x1x128x128xf32> to vector<128x128xf32>
    %73 = vector.shape_cast %70 : vector<128x128xf32> to vector<1x1x128x128xf32>
    tpu.vector_store %arg5[%c0_74, %c0_75, %c0_76, %c0_77], %73 {strides = array<i32>} : memref<1x1x128x128xf32, #tpu.memory_space<vmem>>, vector<1x1x128x128xf32>,
    return
  }
  func.func @transform_0(%arg0: i32, %arg1: i32) -> (i32, i32, i32, i32, i32) {
    %c0_i32 = arith.constant 0 : i32
    %c0_i32_0 = arith.constant 0 : i32
    %c0_i32_1 = arith.constant 0 : i32
    %c0_i32_2 = arith.constant 0 : i32
    return %arg0, %arg1, %c0_i32, %c0_i32_0, %c0_i32_1 : i32, i32, i32, i32, i32
  }
  func.func @transform_1(%arg0: i32, %arg1: i32) -> (i32, i32, i32) {
    %c0_i32 = arith.constant 0 : i32
    %c0_i32_0 = arith.constant 0 : i32
    %c0_i32_1 = arith.constant 0 : i32
    %c0_i32_2 = arith.constant 0 : i32
    return %c0_i32, %c0_i32_0, %c0_i32_1 : i32, i32, i32
  }
  func.func @transform_2(%arg0: i32, %arg1: i32) -> (i32, i32) {
    %c0_i32 = arith.constant 0 : i32
    %c0_i32_0 = arith.constant 0 : i32
    %c0_i32_1 = arith.constant 0 : i32
    return %c0_i32, %c0_i32_0 : i32, i32
  }
  func.func @transform_3(%arg0: i32, %arg1: i32) -> (i32, i32, i32, i32) {
    %c0_i32 = arith.constant 0 : i32
    %c0_i32_0 = arith.constant 0 : i32
    %c0_i32_1 = arith.constant 0 : i32
    return %arg0, %arg1, %c0_i32, %c0_i32_0 : i32, i32, i32, i32
  }
}

</mosaic_0001>

<llo_original>
// kernel: tpu_custom_call.1
$region0: #{tpu_custom_call.1}
  #allocation0 [shape = 'u32[]', space=smem, size = 0x4, offset = 0x4, fixed_abs, tag = 'smem constant byte address 0x4 - core index']
  #allocation1 [shape = 'u32[144,128]{1,0:T(1,128)}', space=vmem, size = 0x12000, scoped, tag = 'internal scratch']
  %s0 = inlined_call_operand.vmem [shape: bf16[2,2,10,18,128], index: 0, kind: input, shape index: {}]
  %s1 = inlined_call_operand.vmem [shape: bf16[9,128,128], index: 1, kind: input, shape index: {}]
  %s2 = inlined_call_operand.vmem [shape: f32[1,128], index: 2, kind: input, shape index: {}]
  %s3 = inlined_call_operand.hbm [shape: f32[2,2,128,128], index: 3, kind: output, shape index: {}]
  %s4 = sld [smem:[#allocation0]]
  $region45: #{tpu_custom_call.1} parent=0
    _
  %s6 = ssub.s32 1, %s4
  %s7 = scalar_select 0, %s6, %s4
  $region1: #{tpu_custom_call.1} parent=0
    #allocation2 [shape = 'u8[131072]{0}', space=vmem, size = 0x20000, scoped, tag = 'output window, operand 0']
    #allocation3 [shape = 's32[2]{0}', space=sflag, size = 0x8, scoped, tag = 'scoped memory for tpu_custom_call.1']
    %8 = vsyncpa [#allocation3], 0
    %s9 = scalar_lea.sflag [#allocation3], 1
    %10 = vsyncpa %s9, 0
    loop: start=0, step=1, limit=6
    $region2: #{tpu_custom_call.1} parent=1 // loop_pre_header
      _
    $region3: #{tpu_custom_call.1} parent=1 // loop_header
      %s12 = sphi 0, %s16
      %p13 = scmp.ge.s32.totalorder %s12, 6
      %s19 = sphi 0, %s31
      %s20 = sphi 0, %s27
      %s21 = sphi 0, %s19
      %s22 = sphi 0, %s20
      %s23 = sphi 0, %s21
      %s24 = sphi 0, %s22
      %s36 = sphi 0, %s38
      %s39 = sphi 0, %s36
      %s40 = sphi 0, %s39
      %s56 = sphi 0, %s40
      %s60 = sphi 0, %s60
      %s62 = sphi 0, %s60
      %s63 = sphi 0, %s62
      %s77 = sphi 0, %s63
      %s81 = sphi 0, %s81
      %s83 = sphi 0, %s81
      %s84 = sphi 0, %s83
      %s98 = sphi 0, %s84
      %s106 = sphi 0, %s108
      %s109 = sphi 0, %s106
      %s110 = sphi 0, %s109
      %s126 = sphi 0, %s110
    $region4: #{tpu_custom_call.1} parent=1 // loop_header_branch
      %15 = sbr.rel (%p13) target = $region8
    $region5: #{tpu_custom_call.1} parent=1 // loop_body
      %s17 = ssub.s32 %s12, 1
      %s18 = ssub.s32 %s12, 2
      %s25 = sadd.s32 1, %s20
      %p26 = scmp.ge.s32.totalorder %s25, 2
      %s27 = scalar_select %p26, 0, %s25
      %s28 = sadd.s32 1, %s19
      %s29 = scalar_select %p26, %s28, %s19
      %p30 = scmp.ge.s32.totalorder %s29, 2
      %s31 = scalar_select %p30, 0, %s29
      %s32 = ssub.s32 %s19, %s31
      %s33 = ssub.s32 %s20, %s27
      %s34 = sor.u32 %s32, %s33
      %p35 = scmp.eq.s32.totalorder %s34, 0
      %s37 = sadd.s32 %s36, 1
      %s38 = scalar_select %p35, %s36, %s37
      %p41 = pneg %p35
      %p42 = scmp.eq.s32.totalorder %s12, 3
      %p43 = por %p41, %p42
      %p44 = scmp.ne.s32.totalorder %s36, %s39
      %p45 = scmp.eq.s32.totalorder %s12, 0
      %p46 = por %p44, %p45
      %p47 = scmp.ne.s32.totalorder %s36, %s39
      %p48 = scmp.eq.s32.totalorder %s17, 3
      %p49 = por %p47, %p48
      %p50 = scmp.ne.s32.totalorder %s39, %s40
      %p51 = scmp.eq.s32.totalorder %s17, 0
      %p52 = por %p50, %p51
      %p53 = scmp.ne.s32.totalorder %s39, %s40
      %p54 = scmp.eq.s32.totalorder %s18, 3
      %p55 = por %p53, %p54
      %p57 = scmp.ne.s32.totalorder %s40, %s56
      %p58 = scmp.eq.s32.totalorder %s18, 0
      %p59 = por %p57, %p58
      %s61 = sadd.s32 %s60, 1
      %p64 = scmp.eq.s32.totalorder %s12, 3
      %p65 = scmp.ne.s32.totalorder %s60, %s62
      %p66 = scmp.eq.s32.totalorder %s12, 0
      %p67 = por %p65, %p66
      %p68 = scmp.ne.s32.totalorder %s60, %s62
      %p69 = scmp.eq.s32.totalorder %s17, 3
      %p70 = por %p68, %p69
      %p71 = scmp.ne.s32.totalorder %s62, %s63
      %p72 = scmp.eq.s32.totalorder %s17, 0
      %p73 = por %p71, %p72
      %p74 = scmp.ne.s32.totalorder %s62, %s63
      %p75 = scmp.eq.s32.totalorder %s18, 3
      %p76 = por %p74, %p75
      %p78 = scmp.ne.s32.totalorder %s63, %s77
      %p79 = scmp.eq.s32.totalorder %s18, 0
      %p80 = por %p78, %p79
      %s82 = sadd.s32 %s81, 1
      %p85 = scmp.eq.s32.totalorder %s12, 3
      %p86 = scmp.ne.s32.totalorder %s81, %s83
      %p87 = scmp.eq.s32.totalorder %s12, 0
      %p88 = por %p86, %p87
      %p89 = scmp.ne.s32.totalorder %s81, %s83
      %p90 = scmp.eq.s32.totalorder %s17, 3
      %p91 = por %p89, %p90
      %p92 = scmp.ne.s32.totalorder %s83, %s84
      %p93 = scmp.eq.s32.totalorder %s17, 0
      %p94 = por %p92, %p93
      %p95 = scmp.ne.s32.totalorder %s83, %s84
      %p96 = scmp.eq.s32.totalorder %s18, 3
      %p97 = por %p95, %p96
      %p99 = scmp.ne.s32.totalorder %s84, %s98
      %p100 = scmp.eq.s32.totalorder %s18, 0
      %p101 = por %p99, %p100
      %s102 = ssub.s32 %s19, %s31
      %s103 = ssub.s32 %s20, %s27
      %s104 = sor.u32 %s102, %s103
      %p105 = scmp.eq.s32.totalorder %s104, 0
      %s107 = sadd.s32 %s106, 1
      %s108 = scalar_select %p105, %s106, %s107
      %p111 = pneg %p105
      %p112 = scmp.eq.s32.totalorder %s12, 3
      %p113 = por %p111, %p112
      %p114 = scmp.ne.s32.totalorder %s106, %s109
      %p115 = scmp.eq.s32.totalorder %s12, 0
      %p116 = por %p114, %p115
      %p117 = scmp.ne.s32.totalorder %s106, %s109
      %p118 = scmp.eq.s32.totalorder %s17, 3
      %p119 = por %p117, %p118
      %p120 = scmp.ne.s32.totalorder %s109, %s110
      %p121 = scmp.eq.s32.totalorder %s17, 0
      %p122 = por %p120, %p121
      %p123 = scmp.ne.s32.totalorder %s109, %s110
      %p124 = scmp.eq.s32.totalorder %s18, 3
      %p125 = por %p123, %p124
      %p127 = scmp.ne.s32.totalorder %s110, %s126
      %p128 = scmp.eq.s32.totalorder %s18, 0
      %p129 = por %p127, %p128
      %p130 = scmp.le.s32.totalorder 1, %s12
      %p131 = scmp.lt.s32.totalorder %s12, 5
      %p132 = pnand %p130, %p131
      %p133 = pneg %p132
      // Predicated region
      $region9: #{tpu_custom_call.1} parent=5 // pred_check
        _
      $region10: #{tpu_custom_call.1} parent=5 // pred_check_branch
        %135 = sbr.rel (%p132) target = $region12
      $region11: #{tpu_custom_call.1} parent=5 // pred_region
        %s136 = ssub.s32 %s12, 1
        // Predicated region
        $region13: #{tpu_custom_call.1} parent=11 // pred_check
          %p137 = pneg %p73
        $region14: #{tpu_custom_call.1} parent=11 // pred_check_branch
          %139 = sbr.rel (%p137) target = $region16
        $region15: #{tpu_custom_call.1} parent=11 // pred_region
          _
        $region16: #{tpu_custom_call.1} parent=11 // pred_fallthru
          _
        // Predicated region
        $region17: #{tpu_custom_call.1} parent=11 // pred_check
          %p140 = pneg %p94
        $region18: #{tpu_custom_call.1} parent=11 // pred_check_branch
          %142 = sbr.rel (%p140) target = $region20
        $region19: #{tpu_custom_call.1} parent=11 // pred_region
          _
        $region20: #{tpu_custom_call.1} parent=11 // pred_fallthru
          _
      $region12: #{tpu_custom_call.1} parent=5 // pred_fallthru
        _
      %p143 = scmp.lt.s32.totalorder %s12, 4
      // Predicated region
      $region21: #{tpu_custom_call.1} parent=5 // pred_check
        %p144 = pneg %p143
      $region22: #{tpu_custom_call.1} parent=5 // pred_check_branch
        %146 = sbr.rel (%p144) target = $region24
      $region23: #{tpu_custom_call.1} parent=5 // pred_region
        // Predicated region
        $region25: #{tpu_custom_call.1} parent=23 // pred_check
          %p147 = pneg %p46
        $region26: #{tpu_custom_call.1} parent=23 // pred_check_branch
          %149 = sbr.rel (%p147) target = $region28
        $region27: #{tpu_custom_call.1} parent=23 // pred_region
          %p150 = scmp.lt.s32.totalorder %s19, 1
          %s151 = scalar_select %p150, %s19, 1
          %p152 = scmp.lt.s32.totalorder %s20, 1
          %s153 = scalar_select %p152, %s20, 1
          %s154 = smul.addr %s153, 30
          %s155 = smul.addr %s151, 60
          %s156 = sadd.s32 %s154, %s155
          %s157 = smul.addr %s156, 4
          %s158 = scalar_lea.vmem %s0, %s157
        $region28: #{tpu_custom_call.1} parent=23 // pred_fallthru
          _
      $region24: #{tpu_custom_call.1} parent=5 // pred_fallthru
        _
      %p159 = scmp.le.s32.totalorder 1, %s12
      %p160 = scmp.lt.s32.totalorder %s12, 5
      %p161 = pnand %p159, %p160
      %p162 = pneg %p161
      // Predicated region
      $region29: #{tpu_custom_call.1} parent=5 // pred_check
        _
      $region30: #{tpu_custom_call.1} parent=5 // pred_check_branch
        %164 = sbr.rel (%p161) target = $region32
      $region31: #{tpu_custom_call.1} parent=5 // pred_region
        %s165 = ssub.s32 %s12, 1
        %p166 = scmp.lt.s32.totalorder %s21, 1
        %s167 = scalar_select %p166, %s21, 1
        %p168 = scmp.lt.s32.totalorder %s22, 1
        %s169 = scalar_select %p168, %s22, 1
        %s170 = smul.addr %s169, 30
        %s171 = smul.addr %s167, 60
        %s172 = sadd.s32 %s170, %s171
        %s173 = smul.addr %s172, 4
        %s174 = scalar_lea.vmem %s0, %s173
        %p175 = pneg %p52
        %p176 = pneg %p49
        %p177 = pneg %p73
        %p178 = pneg %p70
        %p179 = pneg %p94
        %p180 = pneg %p91
        %p181 = pneg %p122
        %p182 = pneg %p119
        %s183 = sand.u32 %s109, 1
        %s184 = scalar_lea.sflag [#allocation3], %s183
        %s185 = sand.u32 %s109, 1
        %s186 = smul.addr %s185, 128
        %s187 = scalar_lea.vmem [#allocation2], %s186
        %p188 = scmp.lt.s32.totalorder %s21, 1
        %s189 = scalar_select %p188, %s21, 1
        %p190 = scmp.lt.s32.totalorder %s22, 1
        %s191 = scalar_select %p190, %s22, 1
        %s192 = smul.addr %s191, 30
        %s193 = smul.addr %s189, 60
        %s194 = sadd.s32 %s192, %s193
        %s195 = smul.addr %s194, 4
        %s196 = scalar_lea.vmem %s0, %s195
        %v198 = vld [vmem:[%s196] sm:$0xf]
        %v199 = vld [vmem:[%s196 + $0x4] sm:$0xf]
        %v200 = vld [vmem:[%s196 + $0xc] sm:$0xf]
        %v201 = vld [vmem:[%s196 + $0x10] sm:$0xf]
        %v202 = vld [vmem:[%s196 + $0x18] sm:$0xf]
        %v203 = vld [vmem:[%s196 + $0x1c] sm:$0xf]
        %v204 = vld [vmem:[%s196 + $0x24] sm:$0xf]
        %v205 = vld [vmem:[%s196 + $0x28] sm:$0xf]
        %v206 = vld [vmem:[%s196 + $0x30] sm:$0xf]
        %v207 = vld [vmem:[%s196 + $0x34] sm:$0xf]
        %v208 = vld [vmem:[%s196 + $0x3c] sm:$0xf]
        %v209 = vld [vmem:[%s196 + $0x40] sm:$0xf]
        %v210 = vld [vmem:[%s196 + $0x48] sm:$0xf]
        %v211 = vld [vmem:[%s196 + $0x4c] sm:$0xf]
        %v212 = vld [vmem:[%s196 + $0x54] sm:$0xf]
        %v213 = vld [vmem:[%s196 + $0x58] sm:$0xf]
        %v214 = vld [vmem:[%s1] sm:$0xf]
        %v215 = vld [vmem:[%s1 + $0x4] sm:$0xf]
        %v216 = vld [vmem:[%s1 + $0x8] sm:$0xf]
        %v217 = vld [vmem:[%s1 + $0xc] sm:$0xf]
        %v218 = vld [vmem:[%s1 + $0x10] sm:$0xf]
        %v219 = vld [vmem:[%s1 + $0x14] sm:$0xf]
        %v220 = vld [vmem:[%s1 + $0x18] sm:$0xf]
        %v221 = vld [vmem:[%s1 + $0x1c] sm:$0xf]
        %v222 = vld [vmem:[%s1 + $0x20] sm:$0xf]
        %v223 = vld [vmem:[%s1 + $0x24] sm:$0xf]
        %v224 = vld [vmem:[%s1 + $0x28] sm:$0xf]
        %v225 = vld [vmem:[%s1 + $0x2c] sm:$0xf]
        %v226 = vld [vmem:[%s1 + $0x30] sm:$0xf]
        %v227 = vld [vmem:[%s1 + $0x34] sm:$0xf]
        %v228 = vld [vmem:[%s1 + $0x38] sm:$0xf]
        %v229 = vld [vmem:[%s1 + $0x3c] sm:$0xf]
        %v230 = vld [vmem:[%s196 + $0x8] sm:$0x1]
        %v231 = vld [vmem:[%s196 + $0x14] sm:$0x1]
        %v232 = vld [vmem:[%s196 + $0x20] sm:$0x1]
        %v233 = vld [vmem:[%s196 + $0x2c] sm:$0x1]
        %v234 = vld [vmem:[%s196 + $0x38] sm:$0x1]
        %v235 = vld [vmem:[%s196 + $0x44] sm:$0x1]
        %v236 = vld [vmem:[%s196 + $0x50] sm:$0x1]
        %v237 = vld [vmem:[%s196 + $0x5c] sm:$0x1]
        %vm238 = vsmask.f32 3328
        %vm239 = vsmask.f32 7440
        %vm240 = vmor %vm238, %vm239
        %v242 = vshrl.u32 %v198, 16
        %v244 = vrot.slane %v242, 4
        %v245 = vshll.u32 %v198, 16
        %v247 = vrot.slane %v245, 5
        %v248 = vor.u32 %v244, %v247
        %v249 = vrot.slane %v248, 4
        %v251 = vshll.u32 %v199, 16
        %v253 = vrot.slane %v251, 5
        %v254 = vsel %vm240, %v249, %v253
        %v255 = vshrl.u32 %v199, 16
        %v257 = vrot.slane %v255, 4
        %v258 = vor.u32 %v257, %v253
        %v259 = vrot.slane %v258, 4
        %v261 = vshll.u32 %v230, 16
        %v263 = vrot.slane %v261, 5
        %v264 = vsel %vm240, %v259, %v263
        %v266 = vshrl.u32 %v200, 16
        %v268 = vrot.slane %v266, 4
        %v269 = vshll.u32 %v200, 16
        %v271 = vrot.slane %v269, 5
        %v272 = vor.u32 %v268, %v271
        %v273 = vrot.slane %v272, 4
        %v275 = vshll.u32 %v201, 16
        %v277 = vrot.slane %v275, 5
        %v278 = vsel %vm240, %v273, %v277
        %v279 = vshrl.u32 %v201, 16
        %v281 = vrot.slane %v279, 4
        %v282 = vor.u32 %v281, %v277
        %v283 = vrot.slane %v282, 4
        %v285 = vshll.u32 %v231, 16
        %v287 = vrot.slane %v285, 5
        %v288 = vsel %vm240, %v283, %v287
        %v290 = vshrl.u32 %v202, 16
        %v292 = vrot.slane %v290, 4
        %v293 = vshll.u32 %v202, 16
        %v295 = vrot.slane %v293, 5
        %v296 = vor.u32 %v292, %v295
        %v297 = vrot.slane %v296, 4
        %v299 = vshll.u32 %v203, 16
        %v301 = vrot.slane %v299, 5
        %v302 = vsel %vm240, %v297, %v301
        %v303 = vshrl.u32 %v203, 16
        %v305 = vrot.slane %v303, 4
        %v306 = vor.u32 %v305, %v301
        %v307 = vrot.slane %v306, 4
        %v309 = vshll.u32 %v232, 16
        %v311 = vrot.slane %v309, 5
        %v312 = vsel %vm240, %v307, %v311
        %v314 = vshrl.u32 %v204, 16
        %v316 = vrot.slane %v314, 4
        %v317 = vshll.u32 %v204, 16
        %v319 = vrot.slane %v317, 5
        %v320 = vor.u32 %v316, %v319
        %v321 = vrot.slane %v320, 4
        %v323 = vshll.u32 %v205, 16
        %v325 = vrot.slane %v323, 5
        %v326 = vsel %vm240, %v321, %v325
        %v327 = vshrl.u32 %v205, 16
        %v329 = vrot.slane %v327, 4
        %v330 = vor.u32 %v329, %v325
        %v331 = vrot.slane %v330, 4
        %v333 = vshll.u32 %v233, 16
        %v335 = vrot.slane %v333, 5
        %v336 = vsel %vm240, %v331, %v335
        %v338 = vshrl.u32 %v206, 16
        %v340 = vrot.slane %v338, 4
        %v341 = vshll.u32 %v206, 16
        %v343 = vrot.slane %v341, 5
        %v344 = vor.u32 %v340, %v343
        %v345 = vrot.slane %v344, 4
        %v347 = vshll.u32 %v207, 16
        %v349 = vrot.slane %v347, 5
        %v350 = vsel %vm240, %v345, %v349
        %v351 = vshrl.u32 %v207, 16
        %v353 = vrot.slane %v351, 4
        %v354 = vor.u32 %v353, %v349
        %v355 = vrot.slane %v354, 4
        %v357 = vshll.u32 %v234, 16
        %v359 = vrot.slane %v357, 5
        %v360 = vsel %vm240, %v355, %v359
        %v362 = vshrl.u32 %v208, 16
        %v364 = vrot.slane %v362, 4
        %v365 = vshll.u32 %v208, 16
        %v367 = vrot.slane %v365, 5
        %v368 = vor.u32 %v364, %v367
        %v369 = vrot.slane %v368, 4
        %v371 = vshll.u32 %v209, 16
        %v373 = vrot.slane %v371, 5
        %v374 = vsel %vm240, %v369, %v373
        %v375 = vshrl.u32 %v209, 16
        %v377 = vrot.slane %v375, 4
        %v378 = vor.u32 %v377, %v373
        %v379 = vrot.slane %v378, 4
        %v381 = vshll.u32 %v235, 16
        %v383 = vrot.slane %v381, 5
        %v384 = vsel %vm240, %v379, %v383
        %v386 = vshrl.u32 %v210, 16
        %v388 = vrot.slane %v386, 4
        %v389 = vshll.u32 %v210, 16
        %v391 = vrot.slane %v389, 5
        %v392 = vor.u32 %v388, %v391
        %v393 = vrot.slane %v392, 4
        %v395 = vshll.u32 %v211, 16
        %v397 = vrot.slane %v395, 5
        %v398 = vsel %vm240, %v393, %v397
        %v399 = vshrl.u32 %v211, 16
        %v401 = vrot.slane %v399, 4
        %v402 = vor.u32 %v401, %v397
        %v403 = vrot.slane %v402, 4
        %v405 = vshll.u32 %v236, 16
        %v407 = vrot.slane %v405, 5
        %v408 = vsel %vm240, %v403, %v407
        %v410 = vshrl.u32 %v212, 16
        %v412 = vrot.slane %v410, 4
        %v413 = vshll.u32 %v212, 16
        %v415 = vrot.slane %v413, 5
        %v416 = vor.u32 %v412, %v415
        %v417 = vrot.slane %v416, 4
        %v419 = vshll.u32 %v213, 16
        %v421 = vrot.slane %v419, 5
        %v422 = vsel %vm240, %v417, %v421
        %v423 = vshrl.u32 %v213, 16
        %v425 = vrot.slane %v423, 4
        %v426 = vor.u32 %v425, %v421
        %v427 = vrot.slane %v426, 4
        %v429 = vshll.u32 %v237, 16
        %v431 = vrot.slane %v429, 5
        %v432 = vsel %vm240, %v427, %v431
        %s433 = scalar_lea.vmem %s1, 64
        %v434 = vld [vmem:[%s433] sm:$0xf]
        %v435 = vld [vmem:[%s433 + $0x4] sm:$0xf]
        %v436 = vld [vmem:[%s433 + $0x8] sm:$0xf]
        %v437 = vld [vmem:[%s433 + $0xc] sm:$0xf]
        %v438 = vld [vmem:[%s433 + $0x10] sm:$0xf]
        %v439 = vld [vmem:[%s433 + $0x14] sm:$0xf]
        %v440 = vld [vmem:[%s433 + $0x18] sm:$0xf]
        %v441 = vld [vmem:[%s433 + $0x1c] sm:$0xf]
        %v442 = vld [vmem:[%s433 + $0x20] sm:$0xf]
        %v443 = vld [vmem:[%s433 + $0x24] sm:$0xf]
        %v444 = vld [vmem:[%s433 + $0x28] sm:$0xf]
        %v445 = vld [vmem:[%s433 + $0x2c] sm:$0xf]
        %v446 = vld [vmem:[%s433 + $0x30] sm:$0xf]
        %v447 = vld [vmem:[%s433 + $0x34] sm:$0xf]
        %v448 = vld [vmem:[%s433 + $0x38] sm:$0xf]
        %v449 = vld [vmem:[%s433 + $0x3c] sm:$0xf]
        %v450 = vunpack.c.l.b16 %v254
        %v451 = vunpack.c.l.b16 %v264
        %v452 = vunpack.c.l.b16 %v278
        %v453 = vunpack.c.l.b16 %v288
        %v454 = vunpack.c.l.b16 %v302
        %v455 = vunpack.c.l.b16 %v312
        %v456 = vunpack.c.l.b16 %v326
        %v457 = vunpack.c.l.b16 %v336
        %v458 = vunpack.c.l.b16 %v350
        %v459 = vunpack.c.l.b16 %v360
        %v460 = vunpack.c.l.b16 %v374
        %v461 = vunpack.c.l.b16 %v384
        %v462 = vunpack.c.l.b16 %v398
        %v463 = vunpack.c.l.b16 %v408
        %v464 = vunpack.c.l.b16 %v422
        %v465 = vunpack.c.l.b16 %v432
        %v466 = vpack.c.b16 %v451, %v450
        %v467 = vpack.c.b16 %v453, %v452
        %v468 = vpack.c.b16 %v455, %v454
        %v469 = vpack.c.b16 %v457, %v456
        %v470 = vpack.c.b16 %v459, %v458
        %v471 = vpack.c.b16 %v461, %v460
        %v472 = vpack.c.b16 %v463, %v462
        %v473 = vpack.c.b16 %v465, %v464
        %v498 = vunpack.c.l.b16 %v434
        %v499 = vunpack.c.l.b16 %v435
        %v500 = vunpack.c.l.b16 %v436
        %v501 = vunpack.c.l.b16 %v437
        %v502 = vunpack.c.l.b16 %v438
        %v503 = vunpack.c.l.b16 %v439
        %v504 = vunpack.c.l.b16 %v440
        %v505 = vunpack.c.l.b16 %v441
        %v506 = vunpack.c.l.b16 %v442
        %v507 = vunpack.c.l.b16 %v443
        %v508 = vunpack.c.l.b16 %v444
        %v509 = vunpack.c.l.b16 %v445
        %v510 = vunpack.c.l.b16 %v446
        %v511 = vunpack.c.l.b16 %v447
        %v512 = vunpack.c.l.b16 %v448
        %v513 = vunpack.c.l.b16 %v449
        %v514 = vpack.c.b16 %v499, %v498
        %v515 = vpack.c.b16 %v501, %v500
        %v516 = vpack.c.b16 %v503, %v502
        %v517 = vpack.c.b16 %v505, %v504
        %v518 = vpack.c.b16 %v507, %v506
        %v519 = vpack.c.b16 %v509, %v508
        %v520 = vpack.c.b16 %v511, %v510
        %v521 = vpack.c.b16 %v513, %v512
        %530 = vmatprep.subr.bf16.mxu0 0
        %531 = vmatpush1.bf16.msra.mxu0 %v521
        %532 = vmatprep.subr.bf16.mxu0 0
        %533 = vmatpush1.bf16.msra.mxu0 %v520
        %534 = vmatprep.subr.bf16.mxu0 0
        %535 = vmatpush1.bf16.msra.mxu0 %v519
        %536 = vmatprep.subr.bf16.mxu0 0
        %537 = vmatpush1.bf16.msra.mxu0 %v518
        %538 = vmatprep.subr.bf16.mxu0 0
        %539 = vmatpush1.bf16.msra.mxu0 %v517
        %540 = vmatprep.subr.bf16.mxu0 0
        %541 = vmatpush1.bf16.msra.mxu0 %v516
        %542 = vmatprep.subr.bf16.mxu0 0
        %543 = vmatpush1.bf16.msra.mxu0 %v515
        %544 = vmatprep.subr.bf16.mxu0 0
        %545 = vmatpush1.bf16.msra.mxu0 %v514
        %546 = vmatprep.subr.bf16.mxu0 0
        %547 = vmatpush2.bf16.msra.mxu0 0
        %548 = vmatprep.subr.bf16.mxu0 0
        %549 = vmatpush2.bf16.msra.mxu0 0
        %550 = vmatprep.subr.bf16.mxu0 0
        %551 = vmatpush2.bf16.msra.mxu0 0
        %552 = vmatprep.subr.bf16.mxu0 0
        %553 = vmatpush2.bf16.msra.mxu0 0
        %554 = vmatprep.subr.bf16.mxu0 0
        %555 = vmatpush2.bf16.msra.mxu0 0
        %556 = vmatprep.subr.bf16.mxu0 0
        %557 = vmatpush2.bf16.msra.mxu0 0
        %558 = vmatprep.subr.bf16.mxu0 0
        %559 = vmatpush2.bf16.msra.mxu0 0
        %560 = vmatprep.subr.bf16.mxu0 0
        %561 = vmatpush2.bf16.msra.mxu0 0
        %562 = vmatprep.mubr.bf16.mxu0 0
        %563 = vmatmul.mubr.bf16.gmra.mxu0 %v466
        %v564 = vpop.f32.mrf.mxu0
        %v565 = vadd.f32 0.0, %v564
        %v566 = vpop.f32.mrf.mxu0
        %v567 = vpop.f32.mrf.mxu0
        %v568 = vadd.f32 0.0, %v567
        %v569 = vpop.f32.mrf.mxu0
        %570 = vmatprep.mubr.bf16.mxu0 0
        %571 = vmatmul.mubr.bf16.gmra.mxu0 %v467
        %v572 = vpop.f32.mrf.mxu0
        %v573 = vadd.f32 0.0, %v572
        %v574 = vpop.f32.mrf.mxu0
        %v575 = vpop.f32.mrf.mxu0
        %v576 = vadd.f32 0.0, %v575
        %v577 = vpop.f32.mrf.mxu0
        %578 = vmatprep.mubr.bf16.mxu0 0
        %579 = vmatmul.mubr.bf16.gmra.mxu0 %v468
        %v580 = vpop.f32.mrf.mxu0
        %v581 = vadd.f32 0.0, %v580
        %v582 = vpop.f32.mrf.mxu0
        %v583 = vpop.f32.mrf.mxu0
        %v584 = vadd.f32 0.0, %v583
        %v585 = vpop.f32.mrf.mxu0
        %586 = vmatprep.mubr.bf16.mxu0 0
        %587 = vmatmul.mubr.bf16.gmra.mxu0 %v469
        %v588 = vpop.f32.mrf.mxu0
        %v589 = vadd.f32 0.0, %v588
        %v590 = vpop.f32.mrf.mxu0
        %v591 = vpop.f32.mrf.mxu0
        %v592 = vadd.f32 0.0, %v591
        %v593 = vpop.f32.mrf.mxu0
        %594 = vmatprep.mubr.bf16.mxu0 0
        %595 = vmatmul.mubr.bf16.gmra.mxu0 %v470
        %v596 = vpop.f32.mrf.mxu0
        %v597 = vadd.f32 0.0, %v596
        %v598 = vpop.f32.mrf.mxu0
        %v599 = vpop.f32.mrf.mxu0
        %v600 = vadd.f32 0.0, %v599
        %v601 = vpop.f32.mrf.mxu0
        %602 = vmatprep.mubr.bf16.mxu0 0
        %603 = vmatmul.mubr.bf16.gmra.mxu0 %v471
        %v604 = vpop.f32.mrf.mxu0
        %v605 = vadd.f32 0.0, %v604
        %v606 = vpop.f32.mrf.mxu0
        %v607 = vpop.f32.mrf.mxu0
        %v608 = vadd.f32 0.0, %v607
        %v609 = vpop.f32.mrf.mxu0
        %610 = vmatprep.mubr.bf16.mxu0 0
        %611 = vmatmul.mubr.bf16.gmra.mxu0 %v472
        %v612 = vpop.f32.mrf.mxu0
        %v613 = vadd.f32 0.0, %v612
        %v614 = vpop.f32.mrf.mxu0
        %v615 = vpop.f32.mrf.mxu0
        %v616 = vadd.f32 0.0, %v615
        %v617 = vpop.f32.mrf.mxu0
        %618 = vmatprep.mubr.bf16.mxu0 0
        %619 = vmatmul.mubr.bf16.gmra.mxu0 %v473
        %v620 = vpop.f32.mrf.mxu0
        %v621 = vadd.f32 0.0, %v620
        %v622 = vpop.f32.mrf.mxu0
        %v623 = vpop.f32.mrf.mxu0
        %v624 = vadd.f32 0.0, %v623
        %v625 = vpop.f32.mrf.mxu0
        %626 = vdwg.mxu0
        %v643 = vunpack.c.l.b16 %v198
        %v644 = vunpack.c.l.b16 %v199
        %v645 = vunpack.c.l.b16 %v200
        %v646 = vunpack.c.l.b16 %v201
        %v647 = vunpack.c.l.b16 %v202
        %v648 = vunpack.c.l.b16 %v203
        %v649 = vunpack.c.l.b16 %v204
        %v650 = vunpack.c.l.b16 %v205
        %v651 = vunpack.c.l.b16 %v206
        %v652 = vunpack.c.l.b16 %v207
        %v653 = vunpack.c.l.b16 %v208
        %v654 = vunpack.c.l.b16 %v209
        %v655 = vunpack.c.l.b16 %v210
        %v656 = vunpack.c.l.b16 %v211
        %v657 = vunpack.c.l.b16 %v212
        %v658 = vunpack.c.l.b16 %v213
        %v659 = vpack.c.b16 %v644, %v643
        %v660 = vpack.c.b16 %v646, %v645
        %v661 = vpack.c.b16 %v648, %v647
        %v662 = vpack.c.b16 %v650, %v649
        %v663 = vpack.c.b16 %v652, %v651
        %v664 = vpack.c.b16 %v654, %v653
        %v665 = vpack.c.b16 %v656, %v655
        %v666 = vpack.c.b16 %v658, %v657
        %v691 = vunpack.c.l.b16 %v214
        %v692 = vunpack.c.l.b16 %v215
        %v693 = vunpack.c.l.b16 %v216
        %v694 = vunpack.c.l.b16 %v217
        %v695 = vunpack.c.l.b16 %v218
        %v696 = vunpack.c.l.b16 %v219
        %v697 = vunpack.c.l.b16 %v220
        %v698 = vunpack.c.l.b16 %v221
        %v699 = vunpack.c.l.b16 %v222
        %v700 = vunpack.c.l.b16 %v223
        %v701 = vunpack.c.l.b16 %v224
        %v702 = vunpack.c.l.b16 %v225
        %v703 = vunpack.c.l.b16 %v226
        %v704 = vunpack.c.l.b16 %v227
        %v705 = vunpack.c.l.b16 %v228
        %v706 = vunpack.c.l.b16 %v229
        %v707 = vpack.c.b16 %v692, %v691
        %v708 = vpack.c.b16 %v694, %v693
        %v709 = vpack.c.b16 %v696, %v695
        %v710 = vpack.c.b16 %v698, %v697
        %v711 = vpack.c.b16 %v700, %v699
        %v712 = vpack.c.b16 %v702, %v701
        %v713 = vpack.c.b16 %v704, %v703
        %v714 = vpack.c.b16 %v706, %v705
        %723 = vmatprep.subr.bf16.mxu0 0
        %724 = vmatpush1.bf16.msra.mxu0 %v714
        %725 = vmatprep.subr.bf16.mxu0 0
        %726 = vmatpush1.bf16.msra.mxu0 %v713
        %727 = vmatprep.subr.bf16.mxu0 0
        %728 = vmatpush1.bf16.msra.mxu0 %v712
        %729 = vmatprep.subr.bf16.mxu0 0
        %730 = vmatpush1.bf16.msra.mxu0 %v711
        %731 = vmatprep.subr.bf16.mxu0 0
        %732 = vmatpush1.bf16.msra.mxu0 %v710
        %733 = vmatprep.subr.bf16.mxu0 0
        %734 = vmatpush1.bf16.msra.mxu0 %v709
        %735 = vmatprep.subr.bf16.mxu0 0
        %736 = vmatpush1.bf16.msra.mxu0 %v708
        %737 = vmatprep.subr.bf16.mxu0 0
        %738 = vmatpush1.bf16.msra.mxu0 %v707
        %739 = vmatprep.subr.bf16.mxu0 0
        %740 = vmatpush2.bf16.msra.mxu0 0
        %741 = vmatprep.subr.bf16.mxu0 0
        %742 = vmatpush2.bf16.msra.mxu0 0
        %743 = vmatprep.subr.bf16.mxu0 0
        %744 = vmatpush2.bf16.msra.mxu0 0
        %745 = vmatprep.subr.bf16.mxu0 0
        %746 = vmatpush2.bf16.msra.mxu0 0
        %747 = vmatprep.subr.bf16.mxu0 0
        %748 = vmatpush2.bf16.msra.mxu0 0
        %749 = vmatprep.subr.bf16.mxu0 0
        %750 = vmatpush2.bf16.msra.mxu0 0
        %751 = vmatprep.subr.bf16.mxu0 0
        %752 = vmatpush2.bf16.msra.mxu0 0
        %753 = vmatprep.subr.bf16.mxu0 0
        %754 = vmatpush2.bf16.msra.mxu0 0
        %755 = vmatprep.mubr.bf16.mxu0 0
        %756 = vmatmul.mubr.bf16.gmra.mxu0 %v659
        %v757 = vpop.f32.mrf.mxu0
        %v758 = vadd.f32 %v565, %v757
        %v759 = vpop.f32.mrf.mxu0
        %v760 = vpop.f32.mrf.mxu0
        %v761 = vadd.f32 %v568, %v760
        %v762 = vpop.f32.mrf.mxu0
        %763 = vmatprep.mubr.bf16.mxu0 0
        %764 = vmatmul.mubr.bf16.gmra.mxu0 %v660
        %v765 = vpop.f32.mrf.mxu0
        %v766 = vadd.f32 %v573, %v765
        %v767 = vpop.f32.mrf.mxu0
        %v768 = vpop.f32.mrf.mxu0
        %v769 = vadd.f32 %v576, %v768
        %v770 = vpop.f32.mrf.mxu0
        %771 = vmatprep.mubr.bf16.mxu0 0
        %772 = vmatmul.mubr.bf16.gmra.mxu0 %v661
        %v773 = vpop.f32.mrf.mxu0
        %v774 = vadd.f32 %v581, %v773
        %v775 = vpop.f32.mrf.mxu0
        %v776 = vpop.f32.mrf.mxu0
        %v777 = vadd.f32 %v584, %v776
        %v778 = vpop.f32.mrf.mxu0
        %779 = vmatprep.mubr.bf16.mxu0 0
        %780 = vmatmul.mubr.bf16.gmra.mxu0 %v662
        %v781 = vpop.f32.mrf.mxu0
        %v782 = vadd.f32 %v589, %v781
        %v783 = vpop.f32.mrf.mxu0
        %v784 = vpop.f32.mrf.mxu0
        %v785 = vadd.f32 %v592, %v784
        %v786 = vpop.f32.mrf.mxu0
        %787 = vmatprep.mubr.bf16.mxu0 0
        %788 = vmatmul.mubr.bf16.gmra.mxu0 %v663
        %v789 = vpop.f32.mrf.mxu0
        %v790 = vadd.f32 %v597, %v789
        %v791 = vpop.f32.mrf.mxu0
        %v792 = vpop.f32.mrf.mxu0
        %v793 = vadd.f32 %v600, %v792
        %v794 = vpop.f32.mrf.mxu0
        %795 = vmatprep.mubr.bf16.mxu0 0
        %796 = vmatmul.mubr.bf16.gmra.mxu0 %v664
        %v797 = vpop.f32.mrf.mxu0
        %v798 = vadd.f32 %v605, %v797
        %v799 = vpop.f32.mrf.mxu0
        %v800 = vpop.f32.mrf.mxu0
        %v801 = vadd.f32 %v608, %v800
        %v802 = vpop.f32.mrf.mxu0
        %803 = vmatprep.mubr.bf16.mxu0 0
        %804 = vmatmul.mubr.bf16.gmra.mxu0 %v665
        %v805 = vpop.f32.mrf.mxu0
        %v806 = vadd.f32 %v613, %v805
        %v807 = vpop.f32.mrf.mxu0
        %v808 = vpop.f32.mrf.mxu0
        %v809 = vadd.f32 %v616, %v808
        %v810 = vpop.f32.mrf.mxu0
        %811 = vmatprep.mubr.bf16.mxu0 0
        %812 = vmatmul.mubr.bf16.gmra.mxu0 %v666
        %v813 = vpop.f32.mrf.mxu0
        %v814 = vadd.f32 %v621, %v813
        %v815 = vpop.f32.mrf.mxu0
        %v816 = vpop.f32.mrf.mxu0
        %v817 = vadd.f32 %v624, %v816
        %v818 = vpop.f32.mrf.mxu0
        %819 = vdwg.mxu0
        %v820 = vld [vmem:[%s196] sm:$0xe]
        %v821 = vld [vmem:[%s196 + $0xc] sm:$0xe]
        %v822 = vld [vmem:[%s196 + $0x18] sm:$0xe]
        %v823 = vld [vmem:[%s196 + $0x24] sm:$0xe]
        %v824 = vld [vmem:[%s196 + $0x30] sm:$0xe]
        %v825 = vld [vmem:[%s196 + $0x3c] sm:$0xe]
        %v826 = vld [vmem:[%s196 + $0x48] sm:$0xe]
        %v827 = vld [vmem:[%s196 + $0x54] sm:$0xe]
        %vm844 = vcmask 1042432
        %vm845 = vcmask 1046532
        %vm846 = vmor %vm844, %vm845
        %v847 = vrot.slane %v820, 5
        %v848 = vrot.slane %v847, 4
        %v849 = vrot.slane %v199, 5
        %v850 = vsel %vm846, %v848, %v849
        %v851 = vrot.slane %v849, 4
        %v852 = vrot.slane %v230, 5
        %v853 = vsel %vm846, %v851, %v852
        %v854 = vrot.slane %v821, 5
        %v855 = vrot.slane %v854, 4
        %v856 = vrot.slane %v201, 5
        %v857 = vsel %vm846, %v855, %v856
        %v858 = vrot.slane %v856, 4
        %v859 = vrot.slane %v231, 5
        %v860 = vsel %vm846, %v858, %v859
        %v861 = vrot.slane %v822, 5
        %v862 = vrot.slane %v861, 4
        %v863 = vrot.slane %v203, 5
        %v864 = vsel %vm846, %v862, %v863
        %v865 = vrot.slane %v863, 4
        %v866 = vrot.slane %v232, 5
        %v867 = vsel %vm846, %v865, %v866
        %v868 = vrot.slane %v823, 5
        %v869 = vrot.slane %v868, 4
        %v870 = vrot.slane %v205, 5
        %v871 = vsel %vm846, %v869, %v870
        %v872 = vrot.slane %v870, 4
        %v873 = vrot.slane %v233, 5
        %v874 = vsel %vm846, %v872, %v873
        %v875 = vrot.slane %v824, 5
        %v876 = vrot.slane %v875, 4
        %v877 = vrot.slane %v207, 5
        %v878 = vsel %vm846, %v876, %v877
        %v879 = vrot.slane %v877, 4
        %v880 = vrot.slane %v234, 5
        %v881 = vsel %vm846, %v879, %v880
        %v882 = vrot.slane %v825, 5
        %v883 = vrot.slane %v882, 4
        %v884 = vrot.slane %v209, 5
        %v885 = vsel %vm846, %v883, %v884
        %v886 = vrot.slane %v884, 4
        %v887 = vrot.slane %v235, 5
        %v888 = vsel %vm846, %v886, %v887
        %v889 = vrot.slane %v826, 5
        %v890 = vrot.slane %v889, 4
        %v891 = vrot.slane %v211, 5
        %v892 = vsel %vm846, %v890, %v891
        %v893 = vrot.slane %v891, 4
        %v894 = vrot.slane %v236, 5
        %v895 = vsel %vm846, %v893, %v894
        %v896 = vrot.slane %v827, 5
        %v897 = vrot.slane %v896, 4
        %v898 = vrot.slane %v213, 5
        %v899 = vsel %vm846, %v897, %v898
        %v900 = vrot.slane %v898, 4
        %v901 = vrot.slane %v237, 5
        %v902 = vsel %vm846, %v900, %v901
        %s903 = scalar_lea.vmem %s1, 128
        %v904 = vld [vmem:[%s903] sm:$0xf]
        %v905 = vld [vmem:[%s903 + $0x4] sm:$0xf]
        %v906 = vld [vmem:[%s903 + $0x8] sm:$0xf]
        %v907 = vld [vmem:[%s903 + $0xc] sm:$0xf]
        %v908 = vld [vmem:[%s903 + $0x10] sm:$0xf]
        %v909 = vld [vmem:[%s903 + $0x14] sm:$0xf]
        %v910 = vld [vmem:[%s903 + $0x18] sm:$0xf]
        %v911 = vld [vmem:[%s903 + $0x1c] sm:$0xf]
        %v912 = vld [vmem:[%s903 + $0x20] sm:$0xf]
        %v913 = vld [vmem:[%s903 + $0x24] sm:$0xf]
        %v914 = vld [vmem:[%s903 + $0x28] sm:$0xf]
        %v915 = vld [vmem:[%s903 + $0x2c] sm:$0xf]
        %v916 = vld [vmem:[%s903 + $0x30] sm:$0xf]
        %v917 = vld [vmem:[%s903 + $0x34] sm:$0xf]
        %v918 = vld [vmem:[%s903 + $0x38] sm:$0xf]
        %v919 = vld [vmem:[%s903 + $0x3c] sm:$0xf]
        %v920 = vunpack.c.l.b16 %v850
        %v921 = vunpack.c.l.b16 %v853
        %v922 = vunpack.c.l.b16 %v857
        %v923 = vunpack.c.l.b16 %v860
        %v924 = vunpack.c.l.b16 %v864
        %v925 = vunpack.c.l.b16 %v867
        %v926 = vunpack.c.l.b16 %v871
        %v927 = vunpack.c.l.b16 %v874
        %v928 = vunpack.c.l.b16 %v878
        %v929 = vunpack.c.l.b16 %v881
        %v930 = vunpack.c.l.b16 %v885
        %v931 = vunpack.c.l.b16 %v888
        %v932 = vunpack.c.l.b16 %v892
        %v933 = vunpack.c.l.b16 %v895
        %v934 = vunpack.c.l.b16 %v899
        %v935 = vunpack.c.l.b16 %v902
        %v936 = vpack.c.b16 %v921, %v920
        %v937 = vpack.c.b16 %v923, %v922
        %v938 = vpack.c.b16 %v925, %v924
        %v939 = vpack.c.b16 %v927, %v926
        %v940 = vpack.c.b16 %v929, %v928
        %v941 = vpack.c.b16 %v931, %v930
        %v942 = vpack.c.b16 %v933, %v932
        %v943 = vpack.c.b16 %v935, %v934
        %v968 = vunpack.c.l.b16 %v904
        %v969 = vunpack.c.l.b16 %v905
        %v970 = vunpack.c.l.b16 %v906
        %v971 = vunpack.c.l.b16 %v907
        %v972 = vunpack.c.l.b16 %v908
        %v973 = vunpack.c.l.b16 %v909
        %v974 = vunpack.c.l.b16 %v910
        %v975 = vunpack.c.l.b16 %v911
        %v976 = vunpack.c.l.b16 %v912
        %v977 = vunpack.c.l.b16 %v913
        %v978 = vunpack.c.l.b16 %v914
        %v979 = vunpack.c.l.b16 %v915
        %v980 = vunpack.c.l.b16 %v916
        %v981 = vunpack.c.l.b16 %v917
        %v982 = vunpack.c.l.b16 %v918
        %v983 = vunpack.c.l.b16 %v919
        %v984 = vpack.c.b16 %v969, %v968
        %v985 = vpack.c.b16 %v971, %v970
        %v986 = vpack.c.b16 %v973, %v972
        %v987 = vpack.c.b16 %v975, %v974
        %v988 = vpack.c.b16 %v977, %v976
        %v989 = vpack.c.b16 %v979, %v978
        %v990 = vpack.c.b16 %v981, %v980
        %v991 = vpack.c.b16 %v983, %v982
        %1000 = vmatprep.subr.bf16.mxu0 0
        %1001 = vmatpush1.bf16.msra.mxu0 %v991
        %1002 = vmatprep.subr.bf16.mxu0 0
        %1003 = vmatpush1.bf16.msra.mxu0 %v990
        %1004 = vmatprep.subr.bf16.mxu0 0
        %1005 = vmatpush1.bf16.msra.mxu0 %v989
        %1006 = vmatprep.subr.bf16.mxu0 0
        %1007 = vmatpush1.bf16.msra.mxu0 %v988
        %1008 = vmatprep.subr.bf16.mxu0 0
        %1009 = vmatpush1.bf16.msra.mxu0 %v987
        %1010 = vmatprep.subr.bf16.mxu0 0
        %1011 = vmatpush1.bf16.msra.mxu0 %v986
        %1012 = vmatprep.subr.bf16.mxu0 0
        %1013 = vmatpush1.bf16.msra.mxu0 %v985
        %1014 = vmatprep.subr.bf16.mxu0 0
        %1015 = vmatpush1.bf16.msra.mxu0 %v984
        %1016 = vmatprep.subr.bf16.mxu0 0
        %1017 = vmatpush2.bf16.msra.mxu0 0
        %1018 = vmatprep.subr.bf16.mxu0 0
        %1019 = vmatpush2.bf16.msra.mxu0 0
        %1020 = vmatprep.subr.bf16.mxu0 0
        %1021 = vmatpush2.bf16.msra.mxu0 0
        %1022 = vmatprep.subr.bf16.mxu0 0
        %1023 = vmatpush2.bf16.msra.mxu0 0
        %1024 = vmatprep.subr.bf16.mxu0 0
        %1025 = vmatpush2.bf16.msra.mxu0 0
        %1026 = vmatprep.subr.bf16.mxu0 0
        %1027 = vmatpush2.bf16.msra.mxu0 0
        %1028 = vmatprep.subr.bf16.mxu0 0
        %1029 = vmatpush2.bf16.msra.mxu0 0
        %1030 = vmatprep.subr.bf16.mxu0 0
        %1031 = vmatpush2.bf16.msra.mxu0 0
        %1032 = vmatprep.mubr.bf16.mxu0 0
        %1033 = vmatmul.mubr.bf16.gmra.mxu0 %v936
        %v1034 = vpop.f32.mrf.mxu0
        %v1035 = vadd.f32 0.0, %v1034
        %v1036 = vpop.f32.mrf.mxu0
        %v1037 = vpop.f32.mrf.mxu0
        %v1038 = vadd.f32 0.0, %v1037
        %v1039 = vpop.f32.mrf.mxu0
        %1040 = vmatprep.mubr.bf16.mxu0 0
        %1041 = vmatmul.mubr.bf16.gmra.mxu0 %v937
        %v1042 = vpop.f32.mrf.mxu0
        %v1043 = vadd.f32 0.0, %v1042
        %v1044 = vpop.f32.mrf.mxu0
        %v1045 = vpop.f32.mrf.mxu0
        %v1046 = vadd.f32 0.0, %v1045
        %v1047 = vpop.f32.mrf.mxu0
        %1048 = vmatprep.mubr.bf16.mxu0 0
        %1049 = vmatmul.mubr.bf16.gmra.mxu0 %v938
        %v1050 = vpop.f32.mrf.mxu0
        %v1051 = vadd.f32 0.0, %v1050
        %v1052 = vpop.f32.mrf.mxu0
        %v1053 = vpop.f32.mrf.mxu0
        %v1054 = vadd.f32 0.0, %v1053
        %v1055 = vpop.f32.mrf.mxu0
        %1056 = vmatprep.mubr.bf16.mxu0 0
        %1057 = vmatmul.mubr.bf16.gmra.mxu0 %v939
        %v1058 = vpop.f32.mrf.mxu0
        %v1059 = vadd.f32 0.0, %v1058
        %v1060 = vpop.f32.mrf.mxu0
        %v1061 = vpop.f32.mrf.mxu0
        %v1062 = vadd.f32 0.0, %v1061
        %v1063 = vpop.f32.mrf.mxu0
        %1064 = vmatprep.mubr.bf16.mxu0 0
        %1065 = vmatmul.mubr.bf16.gmra.mxu0 %v940
        %v1066 = vpop.f32.mrf.mxu0
        %v1067 = vadd.f32 0.0, %v1066
        %v1068 = vpop.f32.mrf.mxu0
        %v1069 = vpop.f32.mrf.mxu0
        %v1070 = vadd.f32 0.0, %v1069
        %v1071 = vpop.f32.mrf.mxu0
        %1072 = vmatprep.mubr.bf16.mxu0 0
        %1073 = vmatmul.mubr.bf16.gmra.mxu0 %v941
        %v1074 = vpop.f32.mrf.mxu0
        %v1075 = vadd.f32 0.0, %v1074
        %v1076 = vpop.f32.mrf.mxu0
        %v1077 = vpop.f32.mrf.mxu0
        %v1078 = vadd.f32 0.0, %v1077
        %v1079 = vpop.f32.mrf.mxu0
        %1080 = vmatprep.mubr.bf16.mxu0 0
        %1081 = vmatmul.mubr.bf16.gmra.mxu0 %v942
        %v1082 = vpop.f32.mrf.mxu0
        %v1083 = vadd.f32 0.0, %v1082
        %v1084 = vpop.f32.mrf.mxu0
        %v1085 = vpop.f32.mrf.mxu0
        %v1086 = vadd.f32 0.0, %v1085
        %v1087 = vpop.f32.mrf.mxu0
        %1088 = vmatprep.mubr.bf16.mxu0 0
        %1089 = vmatmul.mubr.bf16.gmra.mxu0 %v943
        %v1090 = vpop.f32.mrf.mxu0
        %v1091 = vadd.f32 0.0, %v1090
        %v1092 = vpop.f32.mrf.mxu0
        %v1093 = vpop.f32.mrf.mxu0
        %v1094 = vadd.f32 0.0, %v1093
        %v1095 = vpop.f32.mrf.mxu0
        %1096 = vdwg.mxu0
        %v1097 = vadd.f32 %v758, %v1035
        %v1098 = vadd.f32 %v761, %v1038
        %v1099 = vadd.f32 %v766, %v1043
        %v1100 = vadd.f32 %v769, %v1046
        %v1101 = vadd.f32 %v774, %v1051
        %v1102 = vadd.f32 %v777, %v1054
        %v1103 = vadd.f32 %v782, %v1059
        %v1104 = vadd.f32 %v785, %v1062
        %v1105 = vadd.f32 %v790, %v1067
        %v1106 = vadd.f32 %v793, %v1070
        %v1107 = vadd.f32 %v798, %v1075
        %v1108 = vadd.f32 %v801, %v1078
        %v1109 = vadd.f32 %v806, %v1083
        %v1110 = vadd.f32 %v809, %v1086
        %v1111 = vadd.f32 %v814, %v1091
        %v1112 = vadd.f32 %v817, %v1094
        %s1113 = scalar_lea.vmem %s196, 12
        %v1114 = vld [vmem:[%s1113] sm:$0xf]
        %v1115 = vld [vmem:[%s1113 + $0x4] sm:$0xf]
        %v1116 = vld [vmem:[%s1113 + $0xc] sm:$0xf]
        %v1117 = vld [vmem:[%s1113 + $0x10] sm:$0xf]
        %v1118 = vld [vmem:[%s1113 + $0x18] sm:$0xf]
        %v1119 = vld [vmem:[%s1113 + $0x1c] sm:$0xf]
        %v1120 = vld [vmem:[%s1113 + $0x24] sm:$0xf]
        %v1121 = vld [vmem:[%s1113 + $0x28] sm:$0xf]
        %v1122 = vld [vmem:[%s1113 + $0x30] sm:$0xf]
        %v1123 = vld [vmem:[%s1113 + $0x34] sm:$0xf]
        %v1124 = vld [vmem:[%s1113 + $0x3c] sm:$0xf]
        %v1125 = vld [vmem:[%s1113 + $0x40] sm:$0xf]
        %v1126 = vld [vmem:[%s1113 + $0x48] sm:$0xf]
        %v1127 = vld [vmem:[%s1113 + $0x4c] sm:$0xf]
        %v1128 = vld [vmem:[%s1113 + $0x54] sm:$0xf]
        %v1129 = vld [vmem:[%s1113 + $0x58] sm:$0xf]
        %s1130 = scalar_lea.vmem %s1, 192
        %v1131 = vld [vmem:[%s1130] sm:$0xf]
        %v1132 = vld [vmem:[%s1130 + $0x4] sm:$0xf]
        %v1133 = vld [vmem:[%s1130 + $0x8] sm:$0xf]
        %v1134 = vld [vmem:[%s1130 + $0xc] sm:$0xf]
        %v1135 = vld [vmem:[%s1130 + $0x10] sm:$0xf]
        %v1136 = vld [vmem:[%s1130 + $0x14] sm:$0xf]
        %v1137 = vld [vmem:[%s1130 + $0x18] sm:$0xf]
        %v1138 = vld [vmem:[%s1130 + $0x1c] sm:$0xf]
        %v1139 = vld [vmem:[%s1130 + $0x20] sm:$0xf]
        %v1140 = vld [vmem:[%s1130 + $0x24] sm:$0xf]
        %v1141 = vld [vmem:[%s1130 + $0x28] sm:$0xf]
        %v1142 = vld [vmem:[%s1130 + $0x2c] sm:$0xf]
        %v1143 = vld [vmem:[%s1130 + $0x30] sm:$0xf]
        %v1144 = vld [vmem:[%s1130 + $0x34] sm:$0xf]
        %v1145 = vld [vmem:[%s1130 + $0x38] sm:$0xf]
        %v1146 = vld [vmem:[%s1130 + $0x3c] sm:$0xf]
        %v1163 = vunpack.c.l.b16 %v1114
        %v1164 = vunpack.c.l.b16 %v1115
        %v1165 = vunpack.c.l.b16 %v1116
        %v1166 = vunpack.c.l.b16 %v1117
        %v1167 = vunpack.c.l.b16 %v1118
        %v1168 = vunpack.c.l.b16 %v1119
        %v1169 = vunpack.c.l.b16 %v1120
        %v1170 = vunpack.c.l.b16 %v1121
        %v1171 = vunpack.c.l.b16 %v1122
        %v1172 = vunpack.c.l.b16 %v1123
        %v1173 = vunpack.c.l.b16 %v1124
        %v1174 = vunpack.c.l.b16 %v1125
        %v1175 = vunpack.c.l.b16 %v1126
        %v1176 = vunpack.c.l.b16 %v1127
        %v1177 = vunpack.c.l.b16 %v1128
        %v1178 = vunpack.c.l.b16 %v1129
        %v1179 = vpack.c.b16 %v1164, %v1163
        %v1180 = vpack.c.b16 %v1166, %v1165
        %v1181 = vpack.c.b16 %v1168, %v1167
        %v1182 = vpack.c.b16 %v1170, %v1169
        %v1183 = vpack.c.b16 %v1172, %v1171
        %v1184 = vpack.c.b16 %v1174, %v1173
        %v1185 = vpack.c.b16 %v1176, %v1175
        %v1186 = vpack.c.b16 %v1178, %v1177
        %v1211 = vunpack.c.l.b16 %v1131
        %v1212 = vunpack.c.l.b16 %v1132
        %v1213 = vunpack.c.l.b16 %v1133
        %v1214 = vunpack.c.l.b16 %v1134
        %v1215 = vunpack.c.l.b16 %v1135
        %v1216 = vunpack.c.l.b16 %v1136
        %v1217 = vunpack.c.l.b16 %v1137
        %v1218 = vunpack.c.l.b16 %v1138
        %v1219 = vunpack.c.l.b16 %v1139
        %v1220 = vunpack.c.l.b16 %v1140
        %v1221 = vunpack.c.l.b16 %v1141
        %v1222 = vunpack.c.l.b16 %v1142
        %v1223 = vunpack.c.l.b16 %v1143
        %v1224 = vunpack.c.l.b16 %v1144
        %v1225 = vunpack.c.l.b16 %v1145
        %v1226 = vunpack.c.l.b16 %v1146
        %v1227 = vpack.c.b16 %v1212, %v1211
        %v1228 = vpack.c.b16 %v1214, %v1213
        %v1229 = vpack.c.b16 %v1216, %v1215
        %v1230 = vpack.c.b16 %v1218, %v1217
        %v1231 = vpack.c.b16 %v1220, %v1219
        %v1232 = vpack.c.b16 %v1222, %v1221
        %v1233 = vpack.c.b16 %v1224, %v1223
        %v1234 = vpack.c.b16 %v1226, %v1225
        %1243 = vmatprep.subr.bf16.mxu0 0
        %1244 = vmatpush1.bf16.msra.mxu0 %v1234
        %1245 = vmatprep.subr.bf16.mxu0 0
        %1246 = vmatpush1.bf16.msra.mxu0 %v1233
        %1247 = vmatprep.subr.bf16.mxu0 0
        %1248 = vmatpush1.bf16.msra.mxu0 %v1232
        %1249 = vmatprep.subr.bf16.mxu0 0
        %1250 = vmatpush1.bf16.msra.mxu0 %v1231
        %1251 = vmatprep.subr.bf16.mxu0 0
        %1252 = vmatpush1.bf16.msra.mxu0 %v1230
        %1253 = vmatprep.subr.bf16.mxu0 0
        %1254 = vmatpush1.bf16.msra.mxu0 %v1229
        %1255 = vmatprep.subr.bf16.mxu0 0
        %1256 = vmatpush1.bf16.msra.mxu0 %v1228
        %1257 = vmatprep.subr.bf16.mxu0 0
        %1258 = vmatpush1.bf16.msra.mxu0 %v1227
        %1259 = vmatprep.subr.bf16.mxu0 0
        %1260 = vmatpush2.bf16.msra.mxu0 0
        %1261 = vmatprep.subr.bf16.mxu0 0
        %1262 = vmatpush2.bf16.msra.mxu0 0
        %1263 = vmatprep.subr.bf16.mxu0 0
        %1264 = vmatpush2.bf16.msra.mxu0 0
        %1265 = vmatprep.subr.bf16.mxu0 0
        %1266 = vmatpush2.bf16.msra.mxu0 0
        %1267 = vmatprep.subr.bf16.mxu0 0
        %1268 = vmatpush2.bf16.msra.mxu0 0
        %1269 = vmatprep.subr.bf16.mxu0 0
        %1270 = vmatpush2.bf16.msra.mxu0 0
        %1271 = vmatprep.subr.bf16.mxu0 0
        %1272 = vmatpush2.bf16.msra.mxu0 0
        %1273 = vmatprep.subr.bf16.mxu0 0
        %1274 = vmatpush2.bf16.msra.mxu0 0
        %1275 = vmatprep.mubr.bf16.mxu0 0
        %1276 = vmatmul.mubr.bf16.gmra.mxu0 %v1179
        %v1277 = vpop.f32.mrf.mxu0
        %v1278 = vadd.f32 0.0, %v1277
        %v1279 = vpop.f32.mrf.mxu0
        %v1280 = vpop.f32.mrf.mxu0
        %v1281 = vadd.f32 0.0, %v1280
        %v1282 = vpop.f32.mrf.mxu0
        %1283 = vmatprep.mubr.bf16.mxu0 0
        %1284 = vmatmul.mubr.bf16.gmra.mxu0 %v1180
        %v1285 = vpop.f32.mrf.mxu0
        %v1286 = vadd.f32 0.0, %v1285
        %v1287 = vpop.f32.mrf.mxu0
        %v1288 = vpop.f32.mrf.mxu0
        %v1289 = vadd.f32 0.0, %v1288
        %v1290 = vpop.f32.mrf.mxu0
        %1291 = vmatprep.mubr.bf16.mxu0 0
        %1292 = vmatmul.mubr.bf16.gmra.mxu0 %v1181
        %v1293 = vpop.f32.mrf.mxu0
        %v1294 = vadd.f32 0.0, %v1293
        %v1295 = vpop.f32.mrf.mxu0
        %v1296 = vpop.f32.mrf.mxu0
        %v1297 = vadd.f32 0.0, %v1296
        %v1298 = vpop.f32.mrf.mxu0
        %1299 = vmatprep.mubr.bf16.mxu0 0
        %1300 = vmatmul.mubr.bf16.gmra.mxu0 %v1182
        %v1301 = vpop.f32.mrf.mxu0
        %v1302 = vadd.f32 0.0, %v1301
        %v1303 = vpop.f32.mrf.mxu0
        %v1304 = vpop.f32.mrf.mxu0
        %v1305 = vadd.f32 0.0, %v1304
        %v1306 = vpop.f32.mrf.mxu0
        %1307 = vmatprep.mubr.bf16.mxu0 0
        %1308 = vmatmul.mubr.bf16.gmra.mxu0 %v1183
        %v1309 = vpop.f32.mrf.mxu0
        %v1310 = vadd.f32 0.0, %v1309
        %v1311 = vpop.f32.mrf.mxu0
        %v1312 = vpop.f32.mrf.mxu0
        %v1313 = vadd.f32 0.0, %v1312
        %v1314 = vpop.f32.mrf.mxu0
        %1315 = vmatprep.mubr.bf16.mxu0 0
        %1316 = vmatmul.mubr.bf16.gmra.mxu0 %v1184
        %v1317 = vpop.f32.mrf.mxu0
        %v1318 = vadd.f32 0.0, %v1317
        %v1319 = vpop.f32.mrf.mxu0
        %v1320 = vpop.f32.mrf.mxu0
        %v1321 = vadd.f32 0.0, %v1320
        %v1322 = vpop.f32.mrf.mxu0
        %1323 = vmatprep.mubr.bf16.mxu0 0
        %1324 = vmatmul.mubr.bf16.gmra.mxu0 %v1185
        %v1325 = vpop.f32.mrf.mxu0
        %v1326 = vadd.f32 0.0, %v1325
        %v1327 = vpop.f32.mrf.mxu0
        %v1328 = vpop.f32.mrf.mxu0
        %v1329 = vadd.f32 0.0, %v1328
        %v1330 = vpop.f32.mrf.mxu0
        %1331 = vmatprep.mubr.bf16.mxu0 0
        %1332 = vmatmul.mubr.bf16.gmra.mxu0 %v1186
        %v1333 = vpop.f32.mrf.mxu0
        %v1334 = vadd.f32 0.0, %v1333
        %v1335 = vpop.f32.mrf.mxu0
        %v1336 = vpop.f32.mrf.mxu0
        %v1337 = vadd.f32 0.0, %v1336
        %v1338 = vpop.f32.mrf.mxu0
        %1339 = vdwg.mxu0
        %v1340 = vadd.f32 %v1097, %v1278
        %v1341 = vadd.f32 %v1098, %v1281
        %v1342 = vadd.f32 %v1099, %v1286
        %v1343 = vadd.f32 %v1100, %v1289
        %v1344 = vadd.f32 %v1101, %v1294
        %v1345 = vadd.f32 %v1102, %v1297
        %v1346 = vadd.f32 %v1103, %v1302
        %v1347 = vadd.f32 %v1104, %v1305
        %v1348 = vadd.f32 %v1105, %v1310
        %v1349 = vadd.f32 %v1106, %v1313
        %v1350 = vadd.f32 %v1107, %v1318
        %v1351 = vadd.f32 %v1108, %v1321
        %v1352 = vadd.f32 %v1109, %v1326
        %v1353 = vadd.f32 %v1110, %v1329
        %v1354 = vadd.f32 %v1111, %v1334
        %v1355 = vadd.f32 %v1112, %v1337
        %v1356 = vld [vmem:[%s1113] sm:$0xf]
        %v1357 = vld [vmem:[%s1113 + $0x4] sm:$0xf]
        %v1358 = vld [vmem:[%s1113 + $0x8] sm:$0x1]
        %v1359 = vld [vmem:[%s1113 + $0xc] sm:$0xf]
        %v1360 = vld [vmem:[%s1113 + $0x10] sm:$0xf]
        %v1361 = vld [vmem:[%s1113 + $0x14] sm:$0x1]
        %v1362 = vld [vmem:[%s1113 + $0x18] sm:$0xf]
        %v1363 = vld [vmem:[%s1113 + $0x1c] sm:$0xf]
        %v1364 = vld [vmem:[%s1113 + $0x20] sm:$0x1]
        %v1365 = vld [vmem:[%s1113 + $0x24] sm:$0xf]
        %v1366 = vld [vmem:[%s1113 + $0x28] sm:$0xf]
        %v1367 = vld [vmem:[%s1113 + $0x2c] sm:$0x1]
        %v1368 = vld [vmem:[%s1113 + $0x30] sm:$0xf]
        %v1369 = vld [vmem:[%s1113 + $0x34] sm:$0xf]
        %v1370 = vld [vmem:[%s1113 + $0x38] sm:$0x1]
        %v1371 = vld [vmem:[%s1113 + $0x3c] sm:$0xf]
        %v1372 = vld [vmem:[%s1113 + $0x40] sm:$0xf]
        %v1373 = vld [vmem:[%s1113 + $0x44] sm:$0x1]
        %v1374 = vld [vmem:[%s1113 + $0x48] sm:$0xf]
        %v1375 = vld [vmem:[%s1113 + $0x4c] sm:$0xf]
        %v1376 = vld [vmem:[%s1113 + $0x50] sm:$0x1]
        %v1377 = vld [vmem:[%s1113 + $0x54] sm:$0xf]
        %v1378 = vld [vmem:[%s1113 + $0x58] sm:$0xf]
        %v1379 = vld [vmem:[%s1113 + $0x5c] sm:$0x1]
        %v1381 = vshrl.u32 %v1356, 16
        %v1383 = vrot.slane %v1381, 4
        %v1384 = vshll.u32 %v1356, 16
        %v1386 = vrot.slane %v1384, 5
        %v1387 = vor.u32 %v1383, %v1386
        %v1388 = vrot.slane %v1387, 4
        %v1390 = vshll.u32 %v1357, 16
        %v1392 = vrot.slane %v1390, 5
        %v1393 = vsel %vm240, %v1388, %v1392
        %v1394 = vshrl.u32 %v1357, 16
        %v1396 = vrot.slane %v1394, 4
        %v1397 = vor.u32 %v1396, %v1392
        %v1398 = vrot.slane %v1397, 4
        %v1400 = vshll.u32 %v1358, 16
        %v1402 = vrot.slane %v1400, 5
        %v1403 = vsel %vm240, %v1398, %v1402
        %v1405 = vshrl.u32 %v1359, 16
        %v1407 = vrot.slane %v1405, 4
        %v1408 = vshll.u32 %v1359, 16
        %v1410 = vrot.slane %v1408, 5
        %v1411 = vor.u32 %v1407, %v1410
        %v1412 = vrot.slane %v1411, 4
        %v1414 = vshll.u32 %v1360, 16
        %v1416 = vrot.slane %v1414, 5
        %v1417 = vsel %vm240, %v1412, %v1416
        %v1418 = vshrl.u32 %v1360, 16
        %v1420 = vrot.slane %v1418, 4
        %v1421 = vor.u32 %v1420, %v1416
        %v1422 = vrot.slane %v1421, 4
        %v1424 = vshll.u32 %v1361, 16
        %v1426 = vrot.slane %v1424, 5
        %v1427 = vsel %vm240, %v1422, %v1426
        %v1429 = vshrl.u32 %v1362, 16
        %v1431 = vrot.slane %v1429, 4
        %v1432 = vshll.u32 %v1362, 16
        %v1434 = vrot.slane %v1432, 5
        %v1435 = vor.u32 %v1431, %v1434
        %v1436 = vrot.slane %v1435, 4
        %v1438 = vshll.u32 %v1363, 16
        %v1440 = vrot.slane %v1438, 5
        %v1441 = vsel %vm240, %v1436, %v1440
        %v1442 = vshrl.u32 %v1363, 16
        %v1444 = vrot.slane %v1442, 4
        %v1445 = vor.u32 %v1444, %v1440
        %v1446 = vrot.slane %v1445, 4
        %v1448 = vshll.u32 %v1364, 16
        %v1450 = vrot.slane %v1448, 5
        %v1451 = vsel %vm240, %v1446, %v1450
        %v1453 = vshrl.u32 %v1365, 16
        %v1455 = vrot.slane %v1453, 4
        %v1456 = vshll.u32 %v1365, 16
        %v1458 = vrot.slane %v1456, 5
        %v1459 = vor.u32 %v1455, %v1458
        %v1460 = vrot.slane %v1459, 4
        %v1462 = vshll.u32 %v1366, 16
        %v1464 = vrot.slane %v1462, 5
        %v1465 = vsel %vm240, %v1460, %v1464
        %v1466 = vshrl.u32 %v1366, 16
        %v1468 = vrot.slane %v1466, 4
        %v1469 = vor.u32 %v1468, %v1464
        %v1470 = vrot.slane %v1469, 4
        %v1472 = vshll.u32 %v1367, 16
        %v1474 = vrot.slane %v1472, 5
        %v1475 = vsel %vm240, %v1470, %v1474
        %v1477 = vshrl.u32 %v1368, 16
        %v1479 = vrot.slane %v1477, 4
        %v1480 = vshll.u32 %v1368, 16
        %v1482 = vrot.slane %v1480, 5
        %v1483 = vor.u32 %v1479, %v1482
        %v1484 = vrot.slane %v1483, 4
        %v1486 = vshll.u32 %v1369, 16
        %v1488 = vrot.slane %v1486, 5
        %v1489 = vsel %vm240, %v1484, %v1488
        %v1490 = vshrl.u32 %v1369, 16
        %v1492 = vrot.slane %v1490, 4
        %v1493 = vor.u32 %v1492, %v1488
        %v1494 = vrot.slane %v1493, 4
        %v1496 = vshll.u32 %v1370, 16
        %v1498 = vrot.slane %v1496, 5
        %v1499 = vsel %vm240, %v1494, %v1498
        %v1501 = vshrl.u32 %v1371, 16
        %v1503 = vrot.slane %v1501, 4
        %v1504 = vshll.u32 %v1371, 16
        %v1506 = vrot.slane %v1504, 5
        %v1507 = vor.u32 %v1503, %v1506
        %v1508 = vrot.slane %v1507, 4
        %v1510 = vshll.u32 %v1372, 16
        %v1512 = vrot.slane %v1510, 5
        %v1513 = vsel %vm240, %v1508, %v1512
        %v1514 = vshrl.u32 %v1372, 16
        %v1516 = vrot.slane %v1514, 4
        %v1517 = vor.u32 %v1516, %v1512
        %v1518 = vrot.slane %v1517, 4
        %v1520 = vshll.u32 %v1373, 16
        %v1522 = vrot.slane %v1520, 5
        %v1523 = vsel %vm240, %v1518, %v1522
        %v1525 = vshrl.u32 %v1374, 16
        %v1527 = vrot.slane %v1525, 4
        %v1528 = vshll.u32 %v1374, 16
        %v1530 = vrot.slane %v1528, 5
        %v1531 = vor.u32 %v1527, %v1530
        %v1532 = vrot.slane %v1531, 4
        %v1534 = vshll.u32 %v1375, 16
        %v1536 = vrot.slane %v1534, 5
        %v1537 = vsel %vm240, %v1532, %v1536
        %v1538 = vshrl.u32 %v1375, 16
        %v1540 = vrot.slane %v1538, 4
        %v1541 = vor.u32 %v1540, %v1536
        %v1542 = vrot.slane %v1541, 4
        %v1544 = vshll.u32 %v1376, 16
        %v1546 = vrot.slane %v1544, 5
        %v1547 = vsel %vm240, %v1542, %v1546
        %v1549 = vshrl.u32 %v1377, 16
        %v1551 = vrot.slane %v1549, 4
        %v1552 = vshll.u32 %v1377, 16
        %v1554 = vrot.slane %v1552, 5
        %v1555 = vor.u32 %v1551, %v1554
        %v1556 = vrot.slane %v1555, 4
        %v1558 = vshll.u32 %v1378, 16
        %v1560 = vrot.slane %v1558, 5
        %v1561 = vsel %vm240, %v1556, %v1560
        %v1562 = vshrl.u32 %v1378, 16
        %v1564 = vrot.slane %v1562, 4
        %v1565 = vor.u32 %v1564, %v1560
        %v1566 = vrot.slane %v1565, 4
        %v1568 = vshll.u32 %v1379, 16
        %v1570 = vrot.slane %v1568, 5
        %v1571 = vsel %vm240, %v1566, %v1570
        %s1572 = scalar_lea.vmem %s1, 256
        %v1573 = vld [vmem:[%s1572] sm:$0xf]
        %v1574 = vld [vmem:[%s1572 + $0x4] sm:$0xf]
        %v1575 = vld [vmem:[%s1572 + $0x8] sm:$0xf]
        %v1576 = vld [vmem:[%s1572 + $0xc] sm:$0xf]
        %v1577 = vld [vmem:[%s1572 + $0x10] sm:$0xf]
        %v1578 = vld [vmem:[%s1572 + $0x14] sm:$0xf]
        %v1579 = vld [vmem:[%s1572 + $0x18] sm:$0xf]
        %v1580 = vld [vmem:[%s1572 + $0x1c] sm:$0xf]
        %v1581 = vld [vmem:[%s1572 + $0x20] sm:$0xf]
        %v1582 = vld [vmem:[%s1572 + $0x24] sm:$0xf]
        %v1583 = vld [vmem:[%s1572 + $0x28] sm:$0xf]
        %v1584 = vld [vmem:[%s1572 + $0x2c] sm:$0xf]
        %v1585 = vld [vmem:[%s1572 + $0x30] sm:$0xf]
        %v1586 = vld [vmem:[%s1572 + $0x34] sm:$0xf]
        %v1587 = vld [vmem:[%s1572 + $0x38] sm:$0xf]
        %v1588 = vld [vmem:[%s1572 + $0x3c] sm:$0xf]
        %v1589 = vunpack.c.l.b16 %v1393
        %v1590 = vunpack.c.l.b16 %v1403
        %v1591 = vunpack.c.l.b16 %v1417
        %v1592 = vunpack.c.l.b16 %v1427
        %v1593 = vunpack.c.l.b16 %v1441
        %v1594 = vunpack.c.l.b16 %v1451
        %v1595 = vunpack.c.l.b16 %v1465
        %v1596 = vunpack.c.l.b16 %v1475
        %v1597 = vunpack.c.l.b16 %v1489
        %v1598 = vunpack.c.l.b16 %v1499
        %v1599 = vunpack.c.l.b16 %v1513
        %v1600 = vunpack.c.l.b16 %v1523
        %v1601 = vunpack.c.l.b16 %v1537
        %v1602 = vunpack.c.l.b16 %v1547
        %v1603 = vunpack.c.l.b16 %v1561
        %v1604 = vunpack.c.l.b16 %v1571
        %v1605 = vpack.c.b16 %v1590, %v1589
        %v1606 = vpack.c.b16 %v1592, %v1591
        %v1607 = vpack.c.b16 %v1594, %v1593
        %v1608 = vpack.c.b16 %v1596, %v1595
        %v1609 = vpack.c.b16 %v1598, %v1597
        %v1610 = vpack.c.b16 %v1600, %v1599
        %v1611 = vpack.c.b16 %v1602, %v1601
        %v1612 = vpack.c.b16 %v1604, %v1603
        %v1637 = vunpack.c.l.b16 %v1573
        %v1638 = vunpack.c.l.b16 %v1574
        %v1639 = vunpack.c.l.b16 %v1575
        %v1640 = vunpack.c.l.b16 %v1576
        %v1641 = vunpack.c.l.b16 %v1577
        %v1642 = vunpack.c.l.b16 %v1578
        %v1643 = vunpack.c.l.b16 %v1579
        %v1644 = vunpack.c.l.b16 %v1580
        %v1645 = vunpack.c.l.b16 %v1581
        %v1646 = vunpack.c.l.b16 %v1582
        %v1647 = vunpack.c.l.b16 %v1583
        %v1648 = vunpack.c.l.b16 %v1584
        %v1649 = vunpack.c.l.b16 %v1585
        %v1650 = vunpack.c.l.b16 %v1586
        %v1651 = vunpack.c.l.b16 %v1587
        %v1652 = vunpack.c.l.b16 %v1588
        %v1653 = vpack.c.b16 %v1638, %v1637
        %v1654 = vpack.c.b16 %v1640, %v1639
        %v1655 = vpack.c.b16 %v1642, %v1641
        %v1656 = vpack.c.b16 %v1644, %v1643
        %v1657 = vpack.c.b16 %v1646, %v1645
        %v1658 = vpack.c.b16 %v1648, %v1647
        %v1659 = vpack.c.b16 %v1650, %v1649
        %v1660 = vpack.c.b16 %v1652, %v1651
        %1669 = vmatprep.subr.bf16.mxu0 0
        %1670 = vmatpush1.bf16.msra.mxu0 %v1660
        %1671 = vmatprep.subr.bf16.mxu0 0
        %1672 = vmatpush1.bf16.msra.mxu0 %v1659
        %1673 = vmatprep.subr.bf16.mxu0 0
        %1674 = vmatpush1.bf16.msra.mxu0 %v1658
        %1675 = vmatprep.subr.bf16.mxu0 0
        %1676 = vmatpush1.bf16.msra.mxu0 %v1657
        %1677 = vmatprep.subr.bf16.mxu0 0
        %1678 = vmatpush1.bf16.msra.mxu0 %v1656
        %1679 = vmatprep.subr.bf16.mxu0 0
        %1680 = vmatpush1.bf16.msra.mxu0 %v1655
        %1681 = vmatprep.subr.bf16.mxu0 0
        %1682 = vmatpush1.bf16.msra.mxu0 %v1654
        %1683 = vmatprep.subr.bf16.mxu0 0
        %1684 = vmatpush1.bf16.msra.mxu0 %v1653
        %1685 = vmatprep.subr.bf16.mxu0 0
        %1686 = vmatpush2.bf16.msra.mxu0 0
        %1687 = vmatprep.subr.bf16.mxu0 0
        %1688 = vmatpush2.bf16.msra.mxu0 0
        %1689 = vmatprep.subr.bf16.mxu0 0
        %1690 = vmatpush2.bf16.msra.mxu0 0
        %1691 = vmatprep.subr.bf16.mxu0 0
        %1692 = vmatpush2.bf16.msra.mxu0 0
        %1693 = vmatprep.subr.bf16.mxu0 0
        %1694 = vmatpush2.bf16.msra.mxu0 0
        %1695 = vmatprep.subr.bf16.mxu0 0
        %1696 = vmatpush2.bf16.msra.mxu0 0
        %1697 = vmatprep.subr.bf16.mxu0 0
        %1698 = vmatpush2.bf16.msra.mxu0 0
        %1699 = vmatprep.subr.bf16.mxu0 0
        %1700 = vmatpush2.bf16.msra.mxu0 0
        %1701 = vmatprep.mubr.bf16.mxu0 0
        %1702 = vmatmul.mubr.bf16.gmra.mxu0 %v1605
        %v1703 = vpop.f32.mrf.mxu0
        %v1704 = vadd.f32 0.0, %v1703
        %v1705 = vpop.f32.mrf.mxu0
        %v1706 = vpop.f32.mrf.mxu0
        %v1707 = vadd.f32 0.0, %v1706
        %v1708 = vpop.f32.mrf.mxu0
        %1709 = vmatprep.mubr.bf16.mxu0 0
        %1710 = vmatmul.mubr.bf16.gmra.mxu0 %v1606
        %v1711 = vpop.f32.mrf.mxu0
        %v1712 = vadd.f32 0.0, %v1711
        %v1713 = vpop.f32.mrf.mxu0
        %v1714 = vpop.f32.mrf.mxu0
        %v1715 = vadd.f32 0.0, %v1714
        %v1716 = vpop.f32.mrf.mxu0
        %1717 = vmatprep.mubr.bf16.mxu0 0
        %1718 = vmatmul.mubr.bf16.gmra.mxu0 %v1607
        %v1719 = vpop.f32.mrf.mxu0
        %v1720 = vadd.f32 0.0, %v1719
        %v1721 = vpop.f32.mrf.mxu0
        %v1722 = vpop.f32.mrf.mxu0
        %v1723 = vadd.f32 0.0, %v1722
        %v1724 = vpop.f32.mrf.mxu0
        %1725 = vmatprep.mubr.bf16.mxu0 0
        %1726 = vmatmul.mubr.bf16.gmra.mxu0 %v1608
        %v1727 = vpop.f32.mrf.mxu0
        %v1728 = vadd.f32 0.0, %v1727
        %v1729 = vpop.f32.mrf.mxu0
        %v1730 = vpop.f32.mrf.mxu0
        %v1731 = vadd.f32 0.0, %v1730
        %v1732 = vpop.f32.mrf.mxu0
        %1733 = vmatprep.mubr.bf16.mxu0 0
        %1734 = vmatmul.mubr.bf16.gmra.mxu0 %v1609
        %v1735 = vpop.f32.mrf.mxu0
        %v1736 = vadd.f32 0.0, %v1735
        %v1737 = vpop.f32.mrf.mxu0
        %v1738 = vpop.f32.mrf.mxu0
        %v1739 = vadd.f32 0.0, %v1738
        %v1740 = vpop.f32.mrf.mxu0
        %1741 = vmatprep.mubr.bf16.mxu0 0
        %1742 = vmatmul.mubr.bf16.gmra.mxu0 %v1610
        %v1743 = vpop.f32.mrf.mxu0
        %v1744 = vadd.f32 0.0, %v1743
        %v1745 = vpop.f32.mrf.mxu0
        %v1746 = vpop.f32.mrf.mxu0
        %v1747 = vadd.f32 0.0, %v1746
        %v1748 = vpop.f32.mrf.mxu0
        %1749 = vmatprep.mubr.bf16.mxu0 0
        %1750 = vmatmul.mubr.bf16.gmra.mxu0 %v1611
        %v1751 = vpop.f32.mrf.mxu0
        %v1752 = vadd.f32 0.0, %v1751
        %v1753 = vpop.f32.mrf.mxu0
        %v1754 = vpop.f32.mrf.mxu0
        %v1755 = vadd.f32 0.0, %v1754
        %v1756 = vpop.f32.mrf.mxu0
        %1757 = vmatprep.mubr.bf16.mxu0 0
        %1758 = vmatmul.mubr.bf16.gmra.mxu0 %v1612
        %v1759 = vpop.f32.mrf.mxu0
        %v1760 = vadd.f32 0.0, %v1759
        %v1761 = vpop.f32.mrf.mxu0
        %v1762 = vpop.f32.mrf.mxu0
        %v1763 = vadd.f32 0.0, %v1762
        %v1764 = vpop.f32.mrf.mxu0
        %1765 = vdwg.mxu0
        %v1766 = vadd.f32 %v1340, %v1704
        %v1767 = vadd.f32 %v1341, %v1707
        %v1768 = vadd.f32 %v1342, %v1712
        %v1769 = vadd.f32 %v1343, %v1715
        %v1770 = vadd.f32 %v1344, %v1720
        %v1771 = vadd.f32 %v1345, %v1723
        %v1772 = vadd.f32 %v1346, %v1728
        %v1773 = vadd.f32 %v1347, %v1731
        %v1774 = vadd.f32 %v1348, %v1736
        %v1775 = vadd.f32 %v1349, %v1739
        %v1776 = vadd.f32 %v1350, %v1744
        %v1777 = vadd.f32 %v1351, %v1747
        %v1778 = vadd.f32 %v1352, %v1752
        %v1779 = vadd.f32 %v1353, %v1755
        %v1780 = vadd.f32 %v1354, %v1760
        %v1781 = vadd.f32 %v1355, %v1763
        %v1782 = vld [vmem:[%s1113] sm:$0xe]
        %v1783 = vld [vmem:[%s1113 + $0xc] sm:$0xe]
        %v1784 = vld [vmem:[%s1113 + $0x18] sm:$0xe]
        %v1785 = vld [vmem:[%s1113 + $0x24] sm:$0xe]
        %v1786 = vld [vmem:[%s1113 + $0x30] sm:$0xe]
        %v1787 = vld [vmem:[%s1113 + $0x3c] sm:$0xe]
        %v1788 = vld [vmem:[%s1113 + $0x48] sm:$0xe]
        %v1789 = vld [vmem:[%s1113 + $0x54] sm:$0xe]
        %v1814 = vrot.slane %v1782, 5
        %v1815 = vrot.slane %v1814, 4
        %v1816 = vrot.slane %v1357, 5
        %v1817 = vsel %vm846, %v1815, %v1816
        %v1818 = vrot.slane %v1816, 4
        %v1819 = vrot.slane %v1358, 5
        %v1820 = vsel %vm846, %v1818, %v1819
        %v1821 = vrot.slane %v1783, 5
        %v1822 = vrot.slane %v1821, 4
        %v1823 = vrot.slane %v1360, 5
        %v1824 = vsel %vm846, %v1822, %v1823
        %v1825 = vrot.slane %v1823, 4
        %v1826 = vrot.slane %v1361, 5
        %v1827 = vsel %vm846, %v1825, %v1826
        %v1828 = vrot.slane %v1784, 5
        %v1829 = vrot.slane %v1828, 4
        %v1830 = vrot.slane %v1363, 5
        %v1831 = vsel %vm846, %v1829, %v1830
        %v1832 = vrot.slane %v1830, 4
        %v1833 = vrot.slane %v1364, 5
        %v1834 = vsel %vm846, %v1832, %v1833
        %v1835 = vrot.slane %v1785, 5
        %v1836 = vrot.slane %v1835, 4
        %v1837 = vrot.slane %v1366, 5
        %v1838 = vsel %vm846, %v1836, %v1837
        %v1839 = vrot.slane %v1837, 4
        %v1840 = vrot.slane %v1367, 5
        %v1841 = vsel %vm846, %v1839, %v1840
        %v1842 = vrot.slane %v1786, 5
        %v1843 = vrot.slane %v1842, 4
        %v1844 = vrot.slane %v1369, 5
        %v1845 = vsel %vm846, %v1843, %v1844
        %v1846 = vrot.slane %v1844, 4
        %v1847 = vrot.slane %v1370, 5
        %v1848 = vsel %vm846, %v1846, %v1847
        %v1849 = vrot.slane %v1787, 5
        %v1850 = vrot.slane %v1849, 4
        %v1851 = vrot.slane %v1372, 5
        %v1852 = vsel %vm846, %v1850, %v1851
        %v1853 = vrot.slane %v1851, 4
        %v1854 = vrot.slane %v1373, 5
        %v1855 = vsel %vm846, %v1853, %v1854
        %v1856 = vrot.slane %v1788, 5
        %v1857 = vrot.slane %v1856, 4
        %v1858 = vrot.slane %v1375, 5
        %v1859 = vsel %vm846, %v1857, %v1858
        %v1860 = vrot.slane %v1858, 4
        %v1861 = vrot.slane %v1376, 5
        %v1862 = vsel %vm846, %v1860, %v1861
        %v1863 = vrot.slane %v1789, 5
        %v1864 = vrot.slane %v1863, 4
        %v1865 = vrot.slane %v1378, 5
        %v1866 = vsel %vm846, %v1864, %v1865
        %v1867 = vrot.slane %v1865, 4
        %v1868 = vrot.slane %v1379, 5
        %v1869 = vsel %vm846, %v1867, %v1868
        %s1870 = scalar_lea.vmem %s1, 320
        %v1871 = vld [vmem:[%s1870] sm:$0xf]
        %v1872 = vld [vmem:[%s1870 + $0x4] sm:$0xf]
        %v1873 = vld [vmem:[%s1870 + $0x8] sm:$0xf]
        %v1874 = vld [vmem:[%s1870 + $0xc] sm:$0xf]
        %v1875 = vld [vmem:[%s1870 + $0x10] sm:$0xf]
        %v1876 = vld [vmem:[%s1870 + $0x14] sm:$0xf]
        %v1877 = vld [vmem:[%s1870 + $0x18] sm:$0xf]
        %v1878 = vld [vmem:[%s1870 + $0x1c] sm:$0xf]
        %v1879 = vld [vmem:[%s1870 + $0x20] sm:$0xf]
        %v1880 = vld [vmem:[%s1870 + $0x24] sm:$0xf]
        %v1881 = vld [vmem:[%s1870 + $0x28] sm:$0xf]
        %v1882 = vld [vmem:[%s1870 + $0x2c] sm:$0xf]
        %v1883 = vld [vmem:[%s1870 + $0x30] sm:$0xf]
        %v1884 = vld [vmem:[%s1870 + $0x34] sm:$0xf]
        %v1885 = vld [vmem:[%s1870 + $0x38] sm:$0xf]
        %v1886 = vld [vmem:[%s1870 + $0x3c] sm:$0xf]
        %v1887 = vunpack.c.l.b16 %v1817
        %v1888 = vunpack.c.l.b16 %v1820
        %v1889 = vunpack.c.l.b16 %v1824
        %v1890 = vunpack.c.l.b16 %v1827
        %v1891 = vunpack.c.l.b16 %v1831
        %v1892 = vunpack.c.l.b16 %v1834
        %v1893 = vunpack.c.l.b16 %v1838
        %v1894 = vunpack.c.l.b16 %v1841
        %v1895 = vunpack.c.l.b16 %v1845
        %v1896 = vunpack.c.l.b16 %v1848
        %v1897 = vunpack.c.l.b16 %v1852
        %v1898 = vunpack.c.l.b16 %v1855
        %v1899 = vunpack.c.l.b16 %v1859
        %v1900 = vunpack.c.l.b16 %v1862
        %v1901 = vunpack.c.l.b16 %v1866
        %v1902 = vunpack.c.l.b16 %v1869
        %v1903 = vpack.c.b16 %v1888, %v1887
        %v1904 = vpack.c.b16 %v1890, %v1889
        %v1905 = vpack.c.b16 %v1892, %v1891
        %v1906 = vpack.c.b16 %v1894, %v1893
        %v1907 = vpack.c.b16 %v1896, %v1895
        %v1908 = vpack.c.b16 %v1898, %v1897
        %v1909 = vpack.c.b16 %v1900, %v1899
        %v1910 = vpack.c.b16 %v1902, %v1901
        %v1935 = vunpack.c.l.b16 %v1871
        %v1936 = vunpack.c.l.b16 %v1872
        %v1937 = vunpack.c.l.b16 %v1873
        %v1938 = vunpack.c.l.b16 %v1874
        %v1939 = vunpack.c.l.b16 %v1875
        %v1940 = vunpack.c.l.b16 %v1876
        %v1941 = vunpack.c.l.b16 %v1877
        %v1942 = vunpack.c.l.b16 %v1878
        %v1943 = vunpack.c.l.b16 %v1879
        %v1944 = vunpack.c.l.b16 %v1880
        %v1945 = vunpack.c.l.b16 %v1881
        %v1946 = vunpack.c.l.b16 %v1882
        %v1947 = vunpack.c.l.b16 %v1883
        %v1948 = vunpack.c.l.b16 %v1884
        %v1949 = vunpack.c.l.b16 %v1885
        %v1950 = vunpack.c.l.b16 %v1886
        %v1951 = vpack.c.b16 %v1936, %v1935
        %v1952 = vpack.c.b16 %v1938, %v1937
        %v1953 = vpack.c.b16 %v1940, %v1939
        %v1954 = vpack.c.b16 %v1942, %v1941
        %v1955 = vpack.c.b16 %v1944, %v1943
        %v1956 = vpack.c.b16 %v1946, %v1945
        %v1957 = vpack.c.b16 %v1948, %v1947
        %v1958 = vpack.c.b16 %v1950, %v1949
        %1967 = vmatprep.subr.bf16.mxu0 0
        %1968 = vmatpush1.bf16.msra.mxu0 %v1958
        %1969 = vmatprep.subr.bf16.mxu0 0
        %1970 = vmatpush1.bf16.msra.mxu0 %v1957
        %1971 = vmatprep.subr.bf16.mxu0 0
        %1972 = vmatpush1.bf16.msra.mxu0 %v1956
        %1973 = vmatprep.subr.bf16.mxu0 0
        %1974 = vmatpush1.bf16.msra.mxu0 %v1955
        %1975 = vmatprep.subr.bf16.mxu0 0
        %1976 = vmatpush1.bf16.msra.mxu0 %v1954
        %1977 = vmatprep.subr.bf16.mxu0 0
        %1978 = vmatpush1.bf16.msra.mxu0 %v1953
        %1979 = vmatprep.subr.bf16.mxu0 0
        %1980 = vmatpush1.bf16.msra.mxu0 %v1952
        %1981 = vmatprep.subr.bf16.mxu0 0
        %1982 = vmatpush1.bf16.msra.mxu0 %v1951
        %1983 = vmatprep.subr.bf16.mxu0 0
        %1984 = vmatpush2.bf16.msra.mxu0 0
        %1985 = vmatprep.subr.bf16.mxu0 0
        %1986 = vmatpush2.bf16.msra.mxu0 0
        %1987 = vmatprep.subr.bf16.mxu0 0
        %1988 = vmatpush2.bf16.msra.mxu0 0
        %1989 = vmatprep.subr.bf16.mxu0 0
        %1990 = vmatpush2.bf16.msra.mxu0 0
        %1991 = vmatprep.subr.bf16.mxu0 0
        %1992 = vmatpush2.bf16.msra.mxu0 0
        %1993 = vmatprep.subr.bf16.mxu0 0
        %1994 = vmatpush2.bf16.msra.mxu0 0
        %1995 = vmatprep.subr.bf16.mxu0 0
        %1996 = vmatpush2.bf16.msra.mxu0 0
        %1997 = vmatprep.subr.bf16.mxu0 0
        %1998 = vmatpush2.bf16.msra.mxu0 0
        %1999 = vmatprep.mubr.bf16.mxu0 0
        %2000 = vmatmul.mubr.bf16.gmra.mxu0 %v1903
        %v2001 = vpop.f32.mrf.mxu0
        %v2002 = vadd.f32 0.0, %v2001
        %v2003 = vpop.f32.mrf.mxu0
        %v2004 = vpop.f32.mrf.mxu0
        %v2005 = vadd.f32 0.0, %v2004
        %v2006 = vpop.f32.mrf.mxu0
        %2007 = vmatprep.mubr.bf16.mxu0 0
        %2008 = vmatmul.mubr.bf16.gmra.mxu0 %v1904
        %v2009 = vpop.f32.mrf.mxu0
        %v2010 = vadd.f32 0.0, %v2009
        %v2011 = vpop.f32.mrf.mxu0
        %v2012 = vpop.f32.mrf.mxu0
        %v2013 = vadd.f32 0.0, %v2012
        %v2014 = vpop.f32.mrf.mxu0
        %2015 = vmatprep.mubr.bf16.mxu0 0
        %2016 = vmatmul.mubr.bf16.gmra.mxu0 %v1905
        %v2017 = vpop.f32.mrf.mxu0
        %v2018 = vadd.f32 0.0, %v2017
        %v2019 = vpop.f32.mrf.mxu0
        %v2020 = vpop.f32.mrf.mxu0
        %v2021 = vadd.f32 0.0, %v2020
        %v2022 = vpop.f32.mrf.mxu0
        %2023 = vmatprep.mubr.bf16.mxu0 0
        %2024 = vmatmul.mubr.bf16.gmra.mxu0 %v1906
        %v2025 = vpop.f32.mrf.mxu0
        %v2026 = vadd.f32 0.0, %v2025
        %v2027 = vpop.f32.mrf.mxu0
        %v2028 = vpop.f32.mrf.mxu0
        %v2029 = vadd.f32 0.0, %v2028
        %v2030 = vpop.f32.mrf.mxu0
        %2031 = vmatprep.mubr.bf16.mxu0 0
        %2032 = vmatmul.mubr.bf16.gmra.mxu0 %v1907
        %v2033 = vpop.f32.mrf.mxu0
        %v2034 = vadd.f32 0.0, %v2033
        %v2035 = vpop.f32.mrf.mxu0
        %v2036 = vpop.f32.mrf.mxu0
        %v2037 = vadd.f32 0.0, %v2036
        %v2038 = vpop.f32.mrf.mxu0
        %2039 = vmatprep.mubr.bf16.mxu0 0
        %2040 = vmatmul.mubr.bf16.gmra.mxu0 %v1908
        %v2041 = vpop.f32.mrf.mxu0
        %v2042 = vadd.f32 0.0, %v2041
        %v2043 = vpop.f32.mrf.mxu0
        %v2044 = vpop.f32.mrf.mxu0
        %v2045 = vadd.f32 0.0, %v2044
        %v2046 = vpop.f32.mrf.mxu0
        %2047 = vmatprep.mubr.bf16.mxu0 0
        %2048 = vmatmul.mubr.bf16.gmra.mxu0 %v1909
        %v2049 = vpop.f32.mrf.mxu0
        %v2050 = vadd.f32 0.0, %v2049
        %v2051 = vpop.f32.mrf.mxu0
        %v2052 = vpop.f32.mrf.mxu0
        %v2053 = vadd.f32 0.0, %v2052
        %v2054 = vpop.f32.mrf.mxu0
        %2055 = vmatprep.mubr.bf16.mxu0 0
        %2056 = vmatmul.mubr.bf16.gmra.mxu0 %v1910
        %v2057 = vpop.f32.mrf.mxu0
        %v2058 = vadd.f32 0.0, %v2057
        %v2059 = vpop.f32.mrf.mxu0
        %v2060 = vpop.f32.mrf.mxu0
        %v2061 = vadd.f32 0.0, %v2060
        %v2062 = vpop.f32.mrf.mxu0
        %2063 = vdwg.mxu0
        %v2064 = vadd.f32 %v1766, %v2002
        %v2065 = vadd.f32 %v1767, %v2005
        %v2066 = vadd.f32 %v1768, %v2010
        %v2067 = vadd.f32 %v1769, %v2013
        %v2068 = vadd.f32 %v1770, %v2018
        %v2069 = vadd.f32 %v1771, %v2021
        %v2070 = vadd.f32 %v1772, %v2026
        %v2071 = vadd.f32 %v1773, %v2029
        %v2072 = vadd.f32 %v1774, %v2034
        %v2073 = vadd.f32 %v1775, %v2037
        %v2074 = vadd.f32 %v1776, %v2042
        %v2075 = vadd.f32 %v1777, %v2045
        %v2076 = vadd.f32 %v1778, %v2050
        %v2077 = vadd.f32 %v1779, %v2053
        %v2078 = vadd.f32 %v1780, %v2058
        %v2079 = vadd.f32 %v1781, %v2061
        %s2080 = scalar_lea.vmem %s196, 24
        %v2081 = vld [vmem:[%s2080] sm:$0xf]
        %v2082 = vld [vmem:[%s2080 + $0x4] sm:$0xf]
        %v2083 = vld [vmem:[%s2080 + $0xc] sm:$0xf]
        %v2084 = vld [vmem:[%s2080 + $0x10] sm:$0xf]
        %v2085 = vld [vmem:[%s2080 + $0x18] sm:$0xf]
        %v2086 = vld [vmem:[%s2080 + $0x1c] sm:$0xf]
        %v2087 = vld [vmem:[%s2080 + $0x24] sm:$0xf]
        %v2088 = vld [vmem:[%s2080 + $0x28] sm:$0xf]
        %v2089 = vld [vmem:[%s2080 + $0x30] sm:$0xf]
        %v2090 = vld [vmem:[%s2080 + $0x34] sm:$0xf]
        %v2091 = vld [vmem:[%s2080 + $0x3c] sm:$0xf]
        %v2092 = vld [vmem:[%s2080 + $0x40] sm:$0xf]
        %v2093 = vld [vmem:[%s2080 + $0x48] sm:$0xf]
        %v2094 = vld [vmem:[%s2080 + $0x4c] sm:$0xf]
        %v2095 = vld [vmem:[%s2080 + $0x54] sm:$0xf]
        %v2096 = vld [vmem:[%s2080 + $0x58] sm:$0xf]
        %s2097 = scalar_lea.vmem %s1, 384
        %v2098 = vld [vmem:[%s2097] sm:$0xf]
        %v2099 = vld [vmem:[%s2097 + $0x4] sm:$0xf]
        %v2100 = vld [vmem:[%s2097 + $0x8] sm:$0xf]
        %v2101 = vld [vmem:[%s2097 + $0xc] sm:$0xf]
        %v2102 = vld [vmem:[%s2097 + $0x10] sm:$0xf]
        %v2103 = vld [vmem:[%s2097 + $0x14] sm:$0xf]
        %v2104 = vld [vmem:[%s2097 + $0x18] sm:$0xf]
        %v2105 = vld [vmem:[%s2097 + $0x1c] sm:$0xf]
        %v2106 = vld [vmem:[%s2097 + $0x20] sm:$0xf]
        %v2107 = vld [vmem:[%s2097 + $0x24] sm:$0xf]
        %v2108 = vld [vmem:[%s2097 + $0x28] sm:$0xf]
        %v2109 = vld [vmem:[%s2097 + $0x2c] sm:$0xf]
        %v2110 = vld [vmem:[%s2097 + $0x30] sm:$0xf]
        %v2111 = vld [vmem:[%s2097 + $0x34] sm:$0xf]
        %v2112 = vld [vmem:[%s2097 + $0x38] sm:$0xf]
        %v2113 = vld [vmem:[%s2097 + $0x3c] sm:$0xf]
        %v2130 = vunpack.c.l.b16 %v2081
        %v2131 = vunpack.c.l.b16 %v2082
        %v2132 = vunpack.c.l.b16 %v2083
        %v2133 = vunpack.c.l.b16 %v2084
        %v2134 = vunpack.c.l.b16 %v2085
        %v2135 = vunpack.c.l.b16 %v2086
        %v2136 = vunpack.c.l.b16 %v2087
        %v2137 = vunpack.c.l.b16 %v2088
        %v2138 = vunpack.c.l.b16 %v2089
        %v2139 = vunpack.c.l.b16 %v2090
        %v2140 = vunpack.c.l.b16 %v2091
        %v2141 = vunpack.c.l.b16 %v2092
        %v2142 = vunpack.c.l.b16 %v2093
        %v2143 = vunpack.c.l.b16 %v2094
        %v2144 = vunpack.c.l.b16 %v2095
        %v2145 = vunpack.c.l.b16 %v2096
        %v2146 = vpack.c.b16 %v2131, %v2130
        %v2147 = vpack.c.b16 %v2133, %v2132
        %v2148 = vpack.c.b16 %v2135, %v2134
        %v2149 = vpack.c.b16 %v2137, %v2136
        %v2150 = vpack.c.b16 %v2139, %v2138
        %v2151 = vpack.c.b16 %v2141, %v2140
        %v2152 = vpack.c.b16 %v2143, %v2142
        %v2153 = vpack.c.b16 %v2145, %v2144
        %v2178 = vunpack.c.l.b16 %v2098
        %v2179 = vunpack.c.l.b16 %v2099
        %v2180 = vunpack.c.l.b16 %v2100
        %v2181 = vunpack.c.l.b16 %v2101
        %v2182 = vunpack.c.l.b16 %v2102
        %v2183 = vunpack.c.l.b16 %v2103
        %v2184 = vunpack.c.l.b16 %v2104
        %v2185 = vunpack.c.l.b16 %v2105
        %v2186 = vunpack.c.l.b16 %v2106
        %v2187 = vunpack.c.l.b16 %v2107
        %v2188 = vunpack.c.l.b16 %v2108
        %v2189 = vunpack.c.l.b16 %v2109
        %v2190 = vunpack.c.l.b16 %v2110
        %v2191 = vunpack.c.l.b16 %v2111
        %v2192 = vunpack.c.l.b16 %v2112
        %v2193 = vunpack.c.l.b16 %v2113
        %v2194 = vpack.c.b16 %v2179, %v2178
        %v2195 = vpack.c.b16 %v2181, %v2180
        %v2196 = vpack.c.b16 %v2183, %v2182
        %v2197 = vpack.c.b16 %v2185, %v2184
        %v2198 = vpack.c.b16 %v2187, %v2186
        %v2199 = vpack.c.b16 %v2189, %v2188
        %v2200 = vpack.c.b16 %v2191, %v2190
        %v2201 = vpack.c.b16 %v2193, %v2192
        %2210 = vmatprep.subr.bf16.mxu0 0
        %2211 = vmatpush1.bf16.msra.mxu0 %v2201
        %2212 = vmatprep.subr.bf16.mxu0 0
        %2213 = vmatpush1.bf16.msra.mxu0 %v2200
        %2214 = vmatprep.subr.bf16.mxu0 0
        %2215 = vmatpush1.bf16.msra.mxu0 %v2199
        %2216 = vmatprep.subr.bf16.mxu0 0
        %2217 = vmatpush1.bf16.msra.mxu0 %v2198
        %2218 = vmatprep.subr.bf16.mxu0 0
        %2219 = vmatpush1.bf16.msra.mxu0 %v2197
        %2220 = vmatprep.subr.bf16.mxu0 0
        %2221 = vmatpush1.bf16.msra.mxu0 %v2196
        %2222 = vmatprep.subr.bf16.mxu0 0
        %2223 = vmatpush1.bf16.msra.mxu0 %v2195
        %2224 = vmatprep.subr.bf16.mxu0 0
        %2225 = vmatpush1.bf16.msra.mxu0 %v2194
        %2226 = vmatprep.subr.bf16.mxu0 0
        %2227 = vmatpush2.bf16.msra.mxu0 0
        %2228 = vmatprep.subr.bf16.mxu0 0
        %2229 = vmatpush2.bf16.msra.mxu0 0
        %2230 = vmatprep.subr.bf16.mxu0 0
        %2231 = vmatpush2.bf16.msra.mxu0 0
        %2232 = vmatprep.subr.bf16.mxu0 0
        %2233 = vmatpush2.bf16.msra.mxu0 0
        %2234 = vmatprep.subr.bf16.mxu0 0
        %2235 = vmatpush2.bf16.msra.mxu0 0
        %2236 = vmatprep.subr.bf16.mxu0 0
        %2237 = vmatpush2.bf16.msra.mxu0 0
        %2238 = vmatprep.subr.bf16.mxu0 0
        %2239 = vmatpush2.bf16.msra.mxu0 0
        %2240 = vmatprep.subr.bf16.mxu0 0
        %2241 = vmatpush2.bf16.msra.mxu0 0
        %2242 = vmatprep.mubr.bf16.mxu0 0
        %2243 = vmatmul.mubr.bf16.gmra.mxu0 %v2146
        %v2244 = vpop.f32.mrf.mxu0
        %v2245 = vadd.f32 0.0, %v2244
        %v2246 = vpop.f32.mrf.mxu0
        %v2247 = vpop.f32.mrf.mxu0
        %v2248 = vadd.f32 0.0, %v2247
        %v2249 = vpop.f32.mrf.mxu0
        %2250 = vmatprep.mubr.bf16.mxu0 0
        %2251 = vmatmul.mubr.bf16.gmra.mxu0 %v2147
        %v2252 = vpop.f32.mrf.mxu0
        %v2253 = vadd.f32 0.0, %v2252
        %v2254 = vpop.f32.mrf.mxu0
        %v2255 = vpop.f32.mrf.mxu0
        %v2256 = vadd.f32 0.0, %v2255
        %v2257 = vpop.f32.mrf.mxu0
        %2258 = vmatprep.mubr.bf16.mxu0 0
        %2259 = vmatmul.mubr.bf16.gmra.mxu0 %v2148
        %v2260 = vpop.f32.mrf.mxu0
        %v2261 = vadd.f32 0.0, %v2260
        %v2262 = vpop.f32.mrf.mxu0
        %v2263 = vpop.f32.mrf.mxu0
        %v2264 = vadd.f32 0.0, %v2263
        %v2265 = vpop.f32.mrf.mxu0
        %2266 = vmatprep.mubr.bf16.mxu0 0
        %2267 = vmatmul.mubr.bf16.gmra.mxu0 %v2149
        %v2268 = vpop.f32.mrf.mxu0
        %v2269 = vadd.f32 0.0, %v2268
        %v2270 = vpop.f32.mrf.mxu0
        %v2271 = vpop.f32.mrf.mxu0
        %v2272 = vadd.f32 0.0, %v2271
        %v2273 = vpop.f32.mrf.mxu0
        %2274 = vmatprep.mubr.bf16.mxu0 0
        %2275 = vmatmul.mubr.bf16.gmra.mxu0 %v2150
        %v2276 = vpop.f32.mrf.mxu0
        %v2277 = vadd.f32 0.0, %v2276
        %v2278 = vpop.f32.mrf.mxu0
        %v2279 = vpop.f32.mrf.mxu0
        %v2280 = vadd.f32 0.0, %v2279
        %v2281 = vpop.f32.mrf.mxu0
        %2282 = vmatprep.mubr.bf16.mxu0 0
        %2283 = vmatmul.mubr.bf16.gmra.mxu0 %v2151
        %v2284 = vpop.f32.mrf.mxu0
        %v2285 = vadd.f32 0.0, %v2284
        %v2286 = vpop.f32.mrf.mxu0
        %v2287 = vpop.f32.mrf.mxu0
        %v2288 = vadd.f32 0.0, %v2287
        %v2289 = vpop.f32.mrf.mxu0
        %2290 = vmatprep.mubr.bf16.mxu0 0
        %2291 = vmatmul.mubr.bf16.gmra.mxu0 %v2152
        %v2292 = vpop.f32.mrf.mxu0
        %v2293 = vadd.f32 0.0, %v2292
        %v2294 = vpop.f32.mrf.mxu0
        %v2295 = vpop.f32.mrf.mxu0
        %v2296 = vadd.f32 0.0, %v2295
        %v2297 = vpop.f32.mrf.mxu0
        %2298 = vmatprep.mubr.bf16.mxu0 0
        %2299 = vmatmul.mubr.bf16.gmra.mxu0 %v2153
        %v2300 = vpop.f32.mrf.mxu0
        %v2301 = vadd.f32 0.0, %v2300
        %v2302 = vpop.f32.mrf.mxu0
        %v2303 = vpop.f32.mrf.mxu0
        %v2304 = vadd.f32 0.0, %v2303
        %v2305 = vpop.f32.mrf.mxu0
        %2306 = vdwg.mxu0
        %v2307 = vadd.f32 %v2064, %v2245
        %v2308 = vadd.f32 %v2065, %v2248
        %v2309 = vadd.f32 %v2066, %v2253
        %v2310 = vadd.f32 %v2067, %v2256
        %v2311 = vadd.f32 %v2068, %v2261
        %v2312 = vadd.f32 %v2069, %v2264
        %v2313 = vadd.f32 %v2070, %v2269
        %v2314 = vadd.f32 %v2071, %v2272
        %v2315 = vadd.f32 %v2072, %v2277
        %v2316 = vadd.f32 %v2073, %v2280
        %v2317 = vadd.f32 %v2074, %v2285
        %v2318 = vadd.f32 %v2075, %v2288
        %v2319 = vadd.f32 %v2076, %v2293
        %v2320 = vadd.f32 %v2077, %v2296
        %v2321 = vadd.f32 %v2078, %v2301
        %v2322 = vadd.f32 %v2079, %v2304
        %v2323 = vld [vmem:[%s2080] sm:$0xf]
        %v2324 = vld [vmem:[%s2080 + $0x4] sm:$0xf]
        %v2325 = vld [vmem:[%s2080 + $0x8] sm:$0x1]
        %v2326 = vld [vmem:[%s2080 + $0xc] sm:$0xf]
        %v2327 = vld [vmem:[%s2080 + $0x10] sm:$0xf]
        %v2328 = vld [vmem:[%s2080 + $0x14] sm:$0x1]
        %v2329 = vld [vmem:[%s2080 + $0x18] sm:$0xf]
        %v2330 = vld [vmem:[%s2080 + $0x1c] sm:$0xf]
        %v2331 = vld [vmem:[%s2080 + $0x20] sm:$0x1]
        %v2332 = vld [vmem:[%s2080 + $0x24] sm:$0xf]
        %v2333 = vld [vmem:[%s2080 + $0x28] sm:$0xf]
        %v2334 = vld [vmem:[%s2080 + $0x2c] sm:$0x1]
        %v2335 = vld [vmem:[%s2080 + $0x30] sm:$0xf]
        %v2336 = vld [vmem:[%s2080 + $0x34] sm:$0xf]
        %v2337 = vld [vmem:[%s2080 + $0x38] sm:$0x1]
        %v2338 = vld [vmem:[%s2080 + $0x3c] sm:$0xf]
        %v2339 = vld [vmem:[%s2080 + $0x40] sm:$0xf]
        %v2340 = vld [vmem:[%s2080 + $0x44] sm:$0x1]
        %v2341 = vld [vmem:[%s2080 + $0x48] sm:$0xf]
        %v2342 = vld [vmem:[%s2080 + $0x4c] sm:$0xf]
        %v2343 = vld [vmem:[%s2080 + $0x50] sm:$0x1]
        %v2344 = vld [vmem:[%s2080 + $0x54] sm:$0xf]
        %v2345 = vld [vmem:[%s2080 + $0x58] sm:$0xf]
        %v2346 = vld [vmem:[%s2080 + $0x5c] sm:$0x1]
        %v2348 = vshrl.u32 %v2323, 16
        %v2350 = vrot.slane %v2348, 4
        %v2351 = vshll.u32 %v2323, 16
        %v2353 = vrot.slane %v2351, 5
        %v2354 = vor.u32 %v2350, %v2353
        %v2355 = vrot.slane %v2354, 4
        %v2357 = vshll.u32 %v2324, 16
        %v2359 = vrot.slane %v2357, 5
        %v2360 = vsel %vm240, %v2355, %v2359
        %v2361 = vshrl.u32 %v2324, 16
        %v2363 = vrot.slane %v2361, 4
        %v2364 = vor.u32 %v2363, %v2359
        %v2365 = vrot.slane %v2364, 4
        %v2367 = vshll.u32 %v2325, 16
        %v2369 = vrot.slane %v2367, 5
        %v2370 = vsel %vm240, %v2365, %v2369
        %v2372 = vshrl.u32 %v2326, 16
        %v2374 = vrot.slane %v2372, 4
        %v2375 = vshll.u32 %v2326, 16
        %v2377 = vrot.slane %v2375, 5
        %v2378 = vor.u32 %v2374, %v2377
        %v2379 = vrot.slane %v2378, 4
        %v2381 = vshll.u32 %v2327, 16
        %v2383 = vrot.slane %v2381, 5
        %v2384 = vsel %vm240, %v2379, %v2383
        %v2385 = vshrl.u32 %v2327, 16
        %v2387 = vrot.slane %v2385, 4
        %v2388 = vor.u32 %v2387, %v2383
        %v2389 = vrot.slane %v2388, 4
        %v2391 = vshll.u32 %v2328, 16
        %v2393 = vrot.slane %v2391, 5
        %v2394 = vsel %vm240, %v2389, %v2393
        %v2396 = vshrl.u32 %v2329, 16
        %v2398 = vrot.slane %v2396, 4
        %v2399 = vshll.u32 %v2329, 16
        %v2401 = vrot.slane %v2399, 5
        %v2402 = vor.u32 %v2398, %v2401
        %v2403 = vrot.slane %v2402, 4
        %v2405 = vshll.u32 %v2330, 16
        %v2407 = vrot.slane %v2405, 5
        %v2408 = vsel %vm240, %v2403, %v2407
        %v2409 = vshrl.u32 %v2330, 16
        %v2411 = vrot.slane %v2409, 4
        %v2412 = vor.u32 %v2411, %v2407
        %v2413 = vrot.slane %v2412, 4
        %v2415 = vshll.u32 %v2331, 16
        %v2417 = vrot.slane %v2415, 5
        %v2418 = vsel %vm240, %v2413, %v2417
        %v2420 = vshrl.u32 %v2332, 16
        %v2422 = vrot.slane %v2420, 4
        %v2423 = vshll.u32 %v2332, 16
        %v2425 = vrot.slane %v2423, 5
        %v2426 = vor.u32 %v2422, %v2425
        %v2427 = vrot.slane %v2426, 4
        %v2429 = vshll.u32 %v2333, 16
        %v2431 = vrot.slane %v2429, 5
        %v2432 = vsel %vm240, %v2427, %v2431
        %v2433 = vshrl.u32 %v2333, 16
        %v2435 = vrot.slane %v2433, 4
        %v2436 = vor.u32 %v2435, %v2431
        %v2437 = vrot.slane %v2436, 4
        %v2439 = vshll.u32 %v2334, 16
        %v2441 = vrot.slane %v2439, 5
        %v2442 = vsel %vm240, %v2437, %v2441
        %v2444 = vshrl.u32 %v2335, 16
        %v2446 = vrot.slane %v2444, 4
        %v2447 = vshll.u32 %v2335, 16
        %v2449 = vrot.slane %v2447, 5
        %v2450 = vor.u32 %v2446, %v2449
        %v2451 = vrot.slane %v2450, 4
        %v2453 = vshll.u32 %v2336, 16
        %v2455 = vrot.slane %v2453, 5
        %v2456 = vsel %vm240, %v2451, %v2455
        %v2457 = vshrl.u32 %v2336, 16
        %v2459 = vrot.slane %v2457, 4
        %v2460 = vor.u32 %v2459, %v2455
        %v2461 = vrot.slane %v2460, 4
        %v2463 = vshll.u32 %v2337, 16
        %v2465 = vrot.slane %v2463, 5
        %v2466 = vsel %vm240, %v2461, %v2465
        %v2468 = vshrl.u32 %v2338, 16
        %v2470 = vrot.slane %v2468, 4
        %v2471 = vshll.u32 %v2338, 16
        %v2473 = vrot.slane %v2471, 5
        %v2474 = vor.u32 %v2470, %v2473
        %v2475 = vrot.slane %v2474, 4
        %v2477 = vshll.u32 %v2339, 16
        %v2479 = vrot.slane %v2477, 5
        %v2480 = vsel %vm240, %v2475, %v2479
        %v2481 = vshrl.u32 %v2339, 16
        %v2483 = vrot.slane %v2481, 4
        %v2484 = vor.u32 %v2483, %v2479
        %v2485 = vrot.slane %v2484, 4
        %v2487 = vshll.u32 %v2340, 16
        %v2489 = vrot.slane %v2487, 5
        %v2490 = vsel %vm240, %v2485, %v2489
        %v2492 = vshrl.u32 %v2341, 16
        %v2494 = vrot.slane %v2492, 4
        %v2495 = vshll.u32 %v2341, 16
        %v2497 = vrot.slane %v2495, 5
        %v2498 = vor.u32 %v2494, %v2497
        %v2499 = vrot.slane %v2498, 4
        %v2501 = vshll.u32 %v2342, 16
        %v2503 = vrot.slane %v2501, 5
        %v2504 = vsel %vm240, %v2499, %v2503
        %v2505 = vshrl.u32 %v2342, 16
        %v2507 = vrot.slane %v2505, 4
        %v2508 = vor.u32 %v2507, %v2503
        %v2509 = vrot.slane %v2508, 4
        %v2511 = vshll.u32 %v2343, 16
        %v2513 = vrot.slane %v2511, 5
        %v2514 = vsel %vm240, %v2509, %v2513
        %v2516 = vshrl.u32 %v2344, 16
        %v2518 = vrot.slane %v2516, 4
        %v2519 = vshll.u32 %v2344, 16
        %v2521 = vrot.slane %v2519, 5
        %v2522 = vor.u32 %v2518, %v2521
        %v2523 = vrot.slane %v2522, 4
        %v2525 = vshll.u32 %v2345, 16
        %v2527 = vrot.slane %v2525, 5
        %v2528 = vsel %vm240, %v2523, %v2527
        %v2529 = vshrl.u32 %v2345, 16
        %v2531 = vrot.slane %v2529, 4
        %v2532 = vor.u32 %v2531, %v2527
        %v2533 = vrot.slane %v2532, 4
        %v2535 = vshll.u32 %v2346, 16
        %v2537 = vrot.slane %v2535, 5
        %v2538 = vsel %vm240, %v2533, %v2537
        %s2539 = scalar_lea.vmem %s1, 448
        %v2540 = vld [vmem:[%s2539] sm:$0xf]
        %v2541 = vld [vmem:[%s2539 + $0x4] sm:$0xf]
        %v2542 = vld [vmem:[%s2539 + $0x8] sm:$0xf]
        %v2543 = vld [vmem:[%s2539 + $0xc] sm:$0xf]
        %v2544 = vld [vmem:[%s2539 + $0x10] sm:$0xf]
        %v2545 = vld [vmem:[%s2539 + $0x14] sm:$0xf]
        %v2546 = vld [vmem:[%s2539 + $0x18] sm:$0xf]
        %v2547 = vld [vmem:[%s2539 + $0x1c] sm:$0xf]
        %v2548 = vld [vmem:[%s2539 + $0x20] sm:$0xf]
        %v2549 = vld [vmem:[%s2539 + $0x24] sm:$0xf]
        %v2550 = vld [vmem:[%s2539 + $0x28] sm:$0xf]
        %v2551 = vld [vmem:[%s2539 + $0x2c] sm:$0xf]
        %v2552 = vld [vmem:[%s2539 + $0x30] sm:$0xf]
        %v2553 = vld [vmem:[%s2539 + $0x34] sm:$0xf]
        %v2554 = vld [vmem:[%s2539 + $0x38] sm:$0xf]
        %v2555 = vld [vmem:[%s2539 + $0x3c] sm:$0xf]
        %v2556 = vunpack.c.l.b16 %v2360
        %v2557 = vunpack.c.l.b16 %v2370
        %v2558 = vunpack.c.l.b16 %v2384
        %v2559 = vunpack.c.l.b16 %v2394
        %v2560 = vunpack.c.l.b16 %v2408
        %v2561 = vunpack.c.l.b16 %v2418
        %v2562 = vunpack.c.l.b16 %v2432
        %v2563 = vunpack.c.l.b16 %v2442
        %v2564 = vunpack.c.l.b16 %v2456
        %v2565 = vunpack.c.l.b16 %v2466
        %v2566 = vunpack.c.l.b16 %v2480
        %v2567 = vunpack.c.l.b16 %v2490
        %v2568 = vunpack.c.l.b16 %v2504
        %v2569 = vunpack.c.l.b16 %v2514
        %v2570 = vunpack.c.l.b16 %v2528
        %v2571 = vunpack.c.l.b16 %v2538
        %v2572 = vpack.c.b16 %v2557, %v2556
        %v2573 = vpack.c.b16 %v2559, %v2558
        %v2574 = vpack.c.b16 %v2561, %v2560
        %v2575 = vpack.c.b16 %v2563, %v2562
        %v2576 = vpack.c.b16 %v2565, %v2564
        %v2577 = vpack.c.b16 %v2567, %v2566
        %v2578 = vpack.c.b16 %v2569, %v2568
        %v2579 = vpack.c.b16 %v2571, %v2570
        %v2604 = vunpack.c.l.b16 %v2540
        %v2605 = vunpack.c.l.b16 %v2541
        %v2606 = vunpack.c.l.b16 %v2542
        %v2607 = vunpack.c.l.b16 %v2543
        %v2608 = vunpack.c.l.b16 %v2544
        %v2609 = vunpack.c.l.b16 %v2545
        %v2610 = vunpack.c.l.b16 %v2546
        %v2611 = vunpack.c.l.b16 %v2547
        %v2612 = vunpack.c.l.b16 %v2548
        %v2613 = vunpack.c.l.b16 %v2549
        %v2614 = vunpack.c.l.b16 %v2550
        %v2615 = vunpack.c.l.b16 %v2551
        %v2616 = vunpack.c.l.b16 %v2552
        %v2617 = vunpack.c.l.b16 %v2553
        %v2618 = vunpack.c.l.b16 %v2554
        %v2619 = vunpack.c.l.b16 %v2555
        %v2620 = vpack.c.b16 %v2605, %v2604
        %v2621 = vpack.c.b16 %v2607, %v2606
        %v2622 = vpack.c.b16 %v2609, %v2608
        %v2623 = vpack.c.b16 %v2611, %v2610
        %v2624 = vpack.c.b16 %v2613, %v2612
        %v2625 = vpack.c.b16 %v2615, %v2614
        %v2626 = vpack.c.b16 %v2617, %v2616
        %v2627 = vpack.c.b16 %v2619, %v2618
        %2636 = vmatprep.subr.bf16.mxu0 0
        %2637 = vmatpush1.bf16.msra.mxu0 %v2627
        %2638 = vmatprep.subr.bf16.mxu0 0
        %2639 = vmatpush1.bf16.msra.mxu0 %v2626
        %2640 = vmatprep.subr.bf16.mxu0 0
        %2641 = vmatpush1.bf16.msra.mxu0 %v2625
        %2642 = vmatprep.subr.bf16.mxu0 0
        %2643 = vmatpush1.bf16.msra.mxu0 %v2624
        %2644 = vmatprep.subr.bf16.mxu0 0
        %2645 = vmatpush1.bf16.msra.mxu0 %v2623
        %2646 = vmatprep.subr.bf16.mxu0 0
        %2647 = vmatpush1.bf16.msra.mxu0 %v2622
        %2648 = vmatprep.subr.bf16.mxu0 0
        %2649 = vmatpush1.bf16.msra.mxu0 %v2621
        %2650 = vmatprep.subr.bf16.mxu0 0
        %2651 = vmatpush1.bf16.msra.mxu0 %v2620
        %2652 = vmatprep.subr.bf16.mxu0 0
        %2653 = vmatpush2.bf16.msra.mxu0 0
        %2654 = vmatprep.subr.bf16.mxu0 0
        %2655 = vmatpush2.bf16.msra.mxu0 0
        %2656 = vmatprep.subr.bf16.mxu0 0
        %2657 = vmatpush2.bf16.msra.mxu0 0
        %2658 = vmatprep.subr.bf16.mxu0 0
        %2659 = vmatpush2.bf16.msra.mxu0 0
        %2660 = vmatprep.subr.bf16.mxu0 0
        %2661 = vmatpush2.bf16.msra.mxu0 0
        %2662 = vmatprep.subr.bf16.mxu0 0
        %2663 = vmatpush2.bf16.msra.mxu0 0
        %2664 = vmatprep.subr.bf16.mxu0 0
        %2665 = vmatpush2.bf16.msra.mxu0 0
        %2666 = vmatprep.subr.bf16.mxu0 0
        %2667 = vmatpush2.bf16.msra.mxu0 0
        %2668 = vmatprep.mubr.bf16.mxu0 0
        %2669 = vmatmul.mubr.bf16.gmra.mxu0 %v2572
        %v2670 = vpop.f32.mrf.mxu0
        %v2671 = vadd.f32 0.0, %v2670
        %v2672 = vpop.f32.mrf.mxu0
        %v2673 = vpop.f32.mrf.mxu0
        %v2674 = vadd.f32 0.0, %v2673
        %v2675 = vpop.f32.mrf.mxu0
        %2676 = vmatprep.mubr.bf16.mxu0 0
        %2677 = vmatmul.mubr.bf16.gmra.mxu0 %v2573
        %v2678 = vpop.f32.mrf.mxu0
        %v2679 = vadd.f32 0.0, %v2678
        %v2680 = vpop.f32.mrf.mxu0
        %v2681 = vpop.f32.mrf.mxu0
        %v2682 = vadd.f32 0.0, %v2681
        %v2683 = vpop.f32.mrf.mxu0
        %2684 = vmatprep.mubr.bf16.mxu0 0
        %2685 = vmatmul.mubr.bf16.gmra.mxu0 %v2574
        %v2686 = vpop.f32.mrf.mxu0
        %v2687 = vadd.f32 0.0, %v2686
        %v2688 = vpop.f32.mrf.mxu0
        %v2689 = vpop.f32.mrf.mxu0
        %v2690 = vadd.f32 0.0, %v2689
        %v2691 = vpop.f32.mrf.mxu0
        %2692 = vmatprep.mubr.bf16.mxu0 0
        %2693 = vmatmul.mubr.bf16.gmra.mxu0 %v2575
        %v2694 = vpop.f32.mrf.mxu0
        %v2695 = vadd.f32 0.0, %v2694
        %v2696 = vpop.f32.mrf.mxu0
        %v2697 = vpop.f32.mrf.mxu0
        %v2698 = vadd.f32 0.0, %v2697
        %v2699 = vpop.f32.mrf.mxu0
        %2700 = vmatprep.mubr.bf16.mxu0 0
        %2701 = vmatmul.mubr.bf16.gmra.mxu0 %v2576
        %v2702 = vpop.f32.mrf.mxu0
        %v2703 = vadd.f32 0.0, %v2702
        %v2704 = vpop.f32.mrf.mxu0
        %v2705 = vpop.f32.mrf.mxu0
        %v2706 = vadd.f32 0.0, %v2705
        %v2707 = vpop.f32.mrf.mxu0
        %2708 = vmatprep.mubr.bf16.mxu0 0
        %2709 = vmatmul.mubr.bf16.gmra.mxu0 %v2577
        %v2710 = vpop.f32.mrf.mxu0
        %v2711 = vadd.f32 0.0, %v2710
        %v2712 = vpop.f32.mrf.mxu0
        %v2713 = vpop.f32.mrf.mxu0
        %v2714 = vadd.f32 0.0, %v2713
        %v2715 = vpop.f32.mrf.mxu0
        %2716 = vmatprep.mubr.bf16.mxu0 0
        %2717 = vmatmul.mubr.bf16.gmra.mxu0 %v2578
        %v2718 = vpop.f32.mrf.mxu0
        %v2719 = vadd.f32 0.0, %v2718
        %v2720 = vpop.f32.mrf.mxu0
        %v2721 = vpop.f32.mrf.mxu0
        %v2722 = vadd.f32 0.0, %v2721
        %v2723 = vpop.f32.mrf.mxu0
        %2724 = vmatprep.mubr.bf16.mxu0 0
        %2725 = vmatmul.mubr.bf16.gmra.mxu0 %v2579
        %v2726 = vpop.f32.mrf.mxu0
        %v2727 = vadd.f32 0.0, %v2726
        %v2728 = vpop.f32.mrf.mxu0
        %v2729 = vpop.f32.mrf.mxu0
        %v2730 = vadd.f32 0.0, %v2729
        %v2731 = vpop.f32.mrf.mxu0
        %2732 = vdwg.mxu0
        %v2733 = vadd.f32 %v2307, %v2671
        %v2734 = vadd.f32 %v2308, %v2674
        %v2735 = vadd.f32 %v2309, %v2679
        %v2736 = vadd.f32 %v2310, %v2682
        %v2737 = vadd.f32 %v2311, %v2687
        %v2738 = vadd.f32 %v2312, %v2690
        %v2739 = vadd.f32 %v2313, %v2695
        %v2740 = vadd.f32 %v2314, %v2698
        %v2741 = vadd.f32 %v2315, %v2703
        %v2742 = vadd.f32 %v2316, %v2706
        %v2743 = vadd.f32 %v2317, %v2711
        %v2744 = vadd.f32 %v2318, %v2714
        %v2745 = vadd.f32 %v2319, %v2719
        %v2746 = vadd.f32 %v2320, %v2722
        %v2747 = vadd.f32 %v2321, %v2727
        %v2748 = vadd.f32 %v2322, %v2730
        %v2749 = vld [vmem:[%s2080] sm:$0xe]
        %v2750 = vld [vmem:[%s2080 + $0xc] sm:$0xe]
        %v2751 = vld [vmem:[%s2080 + $0x18] sm:$0xe]
        %v2752 = vld [vmem:[%s2080 + $0x24] sm:$0xe]
        %v2753 = vld [vmem:[%s2080 + $0x30] sm:$0xe]
        %v2754 = vld [vmem:[%s2080 + $0x3c] sm:$0xe]
        %v2755 = vld [vmem:[%s2080 + $0x48] sm:$0xe]
        %v2756 = vld [vmem:[%s2080 + $0x54] sm:$0xe]
        %v2781 = vrot.slane %v2749, 5
        %v2782 = vrot.slane %v2781, 4
        %v2783 = vrot.slane %v2324, 5
        %v2784 = vsel %vm846, %v2782, %v2783
        %v2785 = vrot.slane %v2783, 4
        %v2786 = vrot.slane %v2325, 5
        %v2787 = vsel %vm846, %v2785, %v2786
        %v2788 = vrot.slane %v2750, 5
        %v2789 = vrot.slane %v2788, 4
        %v2790 = vrot.slane %v2327, 5
        %v2791 = vsel %vm846, %v2789, %v2790
        %v2792 = vrot.slane %v2790, 4
        %v2793 = vrot.slane %v2328, 5
        %v2794 = vsel %vm846, %v2792, %v2793
        %v2795 = vrot.slane %v2751, 5
        %v2796 = vrot.slane %v2795, 4
        %v2797 = vrot.slane %v2330, 5
        %v2798 = vsel %vm846, %v2796, %v2797
        %v2799 = vrot.slane %v2797, 4
        %v2800 = vrot.slane %v2331, 5
        %v2801 = vsel %vm846, %v2799, %v2800
        %v2802 = vrot.slane %v2752, 5
        %v2803 = vrot.slane %v2802, 4
        %v2804 = vrot.slane %v2333, 5
        %v2805 = vsel %vm846, %v2803, %v2804
        %v2806 = vrot.slane %v2804, 4
        %v2807 = vrot.slane %v2334, 5
        %v2808 = vsel %vm846, %v2806, %v2807
        %v2809 = vrot.slane %v2753, 5
        %v2810 = vrot.slane %v2809, 4
        %v2811 = vrot.slane %v2336, 5
        %v2812 = vsel %vm846, %v2810, %v2811
        %v2813 = vrot.slane %v2811, 4
        %v2814 = vrot.slane %v2337, 5
        %v2815 = vsel %vm846, %v2813, %v2814
        %v2816 = vrot.slane %v2754, 5
        %v2817 = vrot.slane %v2816, 4
        %v2818 = vrot.slane %v2339, 5
        %v2819 = vsel %vm846, %v2817, %v2818
        %v2820 = vrot.slane %v2818, 4
        %v2821 = vrot.slane %v2340, 5
        %v2822 = vsel %vm846, %v2820, %v2821
        %v2823 = vrot.slane %v2755, 5
        %v2824 = vrot.slane %v2823, 4
        %v2825 = vrot.slane %v2342, 5
        %v2826 = vsel %vm846, %v2824, %v2825
        %v2827 = vrot.slane %v2825, 4
        %v2828 = vrot.slane %v2343, 5
        %v2829 = vsel %vm846, %v2827, %v2828
        %v2830 = vrot.slane %v2756, 5
        %v2831 = vrot.slane %v2830, 4
        %v2832 = vrot.slane %v2345, 5
        %v2833 = vsel %vm846, %v2831, %v2832
        %v2834 = vrot.slane %v2832, 4
        %v2835 = vrot.slane %v2346, 5
        %v2836 = vsel %vm846, %v2834, %v2835
        %s2837 = scalar_lea.vmem %s1, 512
        %v2838 = vld [vmem:[%s2837] sm:$0xf]
        %v2839 = vld [vmem:[%s2837 + $0x4] sm:$0xf]
        %v2840 = vld [vmem:[%s2837 + $0x8] sm:$0xf]
        %v2841 = vld [vmem:[%s2837 + $0xc] sm:$0xf]
        %v2842 = vld [vmem:[%s2837 + $0x10] sm:$0xf]
        %v2843 = vld [vmem:[%s2837 + $0x14] sm:$0xf]
        %v2844 = vld [vmem:[%s2837 + $0x18] sm:$0xf]
        %v2845 = vld [vmem:[%s2837 + $0x1c] sm:$0xf]
        %v2846 = vld [vmem:[%s2837 + $0x20] sm:$0xf]
        %v2847 = vld [vmem:[%s2837 + $0x24] sm:$0xf]
        %v2848 = vld [vmem:[%s2837 + $0x28] sm:$0xf]
        %v2849 = vld [vmem:[%s2837 + $0x2c] sm:$0xf]
        %v2850 = vld [vmem:[%s2837 + $0x30] sm:$0xf]
        %v2851 = vld [vmem:[%s2837 + $0x34] sm:$0xf]
        %v2852 = vld [vmem:[%s2837 + $0x38] sm:$0xf]
        %v2853 = vld [vmem:[%s2837 + $0x3c] sm:$0xf]
        %v2854 = vunpack.c.l.b16 %v2784
        %v2855 = vunpack.c.l.b16 %v2787
        %v2856 = vunpack.c.l.b16 %v2791
        %v2857 = vunpack.c.l.b16 %v2794
        %v2858 = vunpack.c.l.b16 %v2798
        %v2859 = vunpack.c.l.b16 %v2801
        %v2860 = vunpack.c.l.b16 %v2805
        %v2861 = vunpack.c.l.b16 %v2808
        %v2862 = vunpack.c.l.b16 %v2812
        %v2863 = vunpack.c.l.b16 %v2815
        %v2864 = vunpack.c.l.b16 %v2819
        %v2865 = vunpack.c.l.b16 %v2822
        %v2866 = vunpack.c.l.b16 %v2826
        %v2867 = vunpack.c.l.b16 %v2829
        %v2868 = vunpack.c.l.b16 %v2833
        %v2869 = vunpack.c.l.b16 %v2836
        %v2870 = vpack.c.b16 %v2855, %v2854
        %v2871 = vpack.c.b16 %v2857, %v2856
        %v2872 = vpack.c.b16 %v2859, %v2858
        %v2873 = vpack.c.b16 %v2861, %v2860
        %v2874 = vpack.c.b16 %v2863, %v2862
        %v2875 = vpack.c.b16 %v2865, %v2864
        %v2876 = vpack.c.b16 %v2867, %v2866
        %v2877 = vpack.c.b16 %v2869, %v2868
        %v2902 = vunpack.c.l.b16 %v2838
        %v2903 = vunpack.c.l.b16 %v2839
        %v2904 = vunpack.c.l.b16 %v2840
        %v2905 = vunpack.c.l.b16 %v2841
        %v2906 = vunpack.c.l.b16 %v2842
        %v2907 = vunpack.c.l.b16 %v2843
        %v2908 = vunpack.c.l.b16 %v2844
        %v2909 = vunpack.c.l.b16 %v2845
        %v2910 = vunpack.c.l.b16 %v2846
        %v2911 = vunpack.c.l.b16 %v2847
        %v2912 = vunpack.c.l.b16 %v2848
        %v2913 = vunpack.c.l.b16 %v2849
        %v2914 = vunpack.c.l.b16 %v2850
        %v2915 = vunpack.c.l.b16 %v2851
        %v2916 = vunpack.c.l.b16 %v2852
        %v2917 = vunpack.c.l.b16 %v2853
        %v2918 = vpack.c.b16 %v2903, %v2902
        %v2919 = vpack.c.b16 %v2905, %v2904
        %v2920 = vpack.c.b16 %v2907, %v2906
        %v2921 = vpack.c.b16 %v2909, %v2908
        %v2922 = vpack.c.b16 %v2911, %v2910
        %v2923 = vpack.c.b16 %v2913, %v2912
        %v2924 = vpack.c.b16 %v2915, %v2914
        %v2925 = vpack.c.b16 %v2917, %v2916
        %2934 = vmatprep.subr.bf16.mxu0 0
        %2935 = vmatpush1.bf16.msra.mxu0 %v2925
        %2936 = vmatprep.subr.bf16.mxu0 0
        %2937 = vmatpush1.bf16.msra.mxu0 %v2924
        %2938 = vmatprep.subr.bf16.mxu0 0
        %2939 = vmatpush1.bf16.msra.mxu0 %v2923
        %2940 = vmatprep.subr.bf16.mxu0 0
        %2941 = vmatpush1.bf16.msra.mxu0 %v2922
        %2942 = vmatprep.subr.bf16.mxu0 0
        %2943 = vmatpush1.bf16.msra.mxu0 %v2921
        %2944 = vmatprep.subr.bf16.mxu0 0
        %2945 = vmatpush1.bf16.msra.mxu0 %v2920
        %2946 = vmatprep.subr.bf16.mxu0 0
        %2947 = vmatpush1.bf16.msra.mxu0 %v2919
        %2948 = vmatprep.subr.bf16.mxu0 0
        %2949 = vmatpush1.bf16.msra.mxu0 %v2918
        %2950 = vmatprep.subr.bf16.mxu0 0
        %2951 = vmatpush2.bf16.msra.mxu0 0
        %2952 = vmatprep.subr.bf16.mxu0 0
        %2953 = vmatpush2.bf16.msra.mxu0 0
        %2954 = vmatprep.subr.bf16.mxu0 0
        %2955 = vmatpush2.bf16.msra.mxu0 0
        %2956 = vmatprep.subr.bf16.mxu0 0
        %2957 = vmatpush2.bf16.msra.mxu0 0
        %2958 = vmatprep.subr.bf16.mxu0 0
        %2959 = vmatpush2.bf16.msra.mxu0 0
        %2960 = vmatprep.subr.bf16.mxu0 0
        %2961 = vmatpush2.bf16.msra.mxu0 0
        %2962 = vmatprep.subr.bf16.mxu0 0
        %2963 = vmatpush2.bf16.msra.mxu0 0
        %2964 = vmatprep.subr.bf16.mxu0 0
        %2965 = vmatpush2.bf16.msra.mxu0 0
        %2966 = vmatprep.mubr.bf16.mxu0 0
        %2967 = vmatmul.mubr.bf16.gmra.mxu0 %v2870
        %v2968 = vpop.f32.mrf.mxu0
        %v2969 = vadd.f32 0.0, %v2968
        %v2970 = vpop.f32.mrf.mxu0
        %v2971 = vpop.f32.mrf.mxu0
        %v2972 = vadd.f32 0.0, %v2971
        %v2973 = vpop.f32.mrf.mxu0
        %2974 = vmatprep.mubr.bf16.mxu0 0
        %2975 = vmatmul.mubr.bf16.gmra.mxu0 %v2871
        %v2976 = vpop.f32.mrf.mxu0
        %v2977 = vadd.f32 0.0, %v2976
        %v2978 = vpop.f32.mrf.mxu0
        %v2979 = vpop.f32.mrf.mxu0
        %v2980 = vadd.f32 0.0, %v2979
        %v2981 = vpop.f32.mrf.mxu0
        %2982 = vmatprep.mubr.bf16.mxu0 0
        %2983 = vmatmul.mubr.bf16.gmra.mxu0 %v2872
        %v2984 = vpop.f32.mrf.mxu0
        %v2985 = vadd.f32 0.0, %v2984
        %v2986 = vpop.f32.mrf.mxu0
        %v2987 = vpop.f32.mrf.mxu0
        %v2988 = vadd.f32 0.0, %v2987
        %v2989 = vpop.f32.mrf.mxu0
        %2990 = vmatprep.mubr.bf16.mxu0 0
        %2991 = vmatmul.mubr.bf16.gmra.mxu0 %v2873
        %v2992 = vpop.f32.mrf.mxu0
        %v2993 = vadd.f32 0.0, %v2992
        %v2994 = vpop.f32.mrf.mxu0
        %v2995 = vpop.f32.mrf.mxu0
        %v2996 = vadd.f32 0.0, %v2995
        %v2997 = vpop.f32.mrf.mxu0
        %2998 = vmatprep.mubr.bf16.mxu0 0
        %2999 = vmatmul.mubr.bf16.gmra.mxu0 %v2874
        %v3000 = vpop.f32.mrf.mxu0
        %v3001 = vadd.f32 0.0, %v3000
        %v3002 = vpop.f32.mrf.mxu0
        %v3003 = vpop.f32.mrf.mxu0
        %v3004 = vadd.f32 0.0, %v3003
        %v3005 = vpop.f32.mrf.mxu0
        %3006 = vmatprep.mubr.bf16.mxu0 0
        %3007 = vmatmul.mubr.bf16.gmra.mxu0 %v2875
        %v3008 = vpop.f32.mrf.mxu0
        %v3009 = vadd.f32 0.0, %v3008
        %v3010 = vpop.f32.mrf.mxu0
        %v3011 = vpop.f32.mrf.mxu0
        %v3012 = vadd.f32 0.0, %v3011
        %v3013 = vpop.f32.mrf.mxu0
        %3014 = vmatprep.mubr.bf16.mxu0 0
        %3015 = vmatmul.mubr.bf16.gmra.mxu0 %v2876
        %v3016 = vpop.f32.mrf.mxu0
        %v3017 = vadd.f32 0.0, %v3016
        %v3018 = vpop.f32.mrf.mxu0
        %v3019 = vpop.f32.mrf.mxu0
        %v3020 = vadd.f32 0.0, %v3019
        %v3021 = vpop.f32.mrf.mxu0
        %3022 = vmatprep.mubr.bf16.mxu0 0
        %3023 = vmatmul.mubr.bf16.gmra.mxu0 %v2877
        %v3024 = vpop.f32.mrf.mxu0
        %v3025 = vadd.f32 0.0, %v3024
        %v3026 = vpop.f32.mrf.mxu0
        %v3027 = vpop.f32.mrf.mxu0
        %v3028 = vadd.f32 0.0, %v3027
        %v3029 = vpop.f32.mrf.mxu0
        %3030 = vdwg.mxu0
        %v3031 = vadd.f32 %v2733, %v2969
        %v3032 = vadd.f32 %v2734, %v2972
        %v3033 = vadd.f32 %v2735, %v2977
        %v3034 = vadd.f32 %v2736, %v2980
        %v3035 = vadd.f32 %v2737, %v2985
        %v3036 = vadd.f32 %v2738, %v2988
        %v3037 = vadd.f32 %v2739, %v2993
        %v3038 = vadd.f32 %v2740, %v2996
        %v3039 = vadd.f32 %v2741, %v3001
        %v3040 = vadd.f32 %v2742, %v3004
        %v3041 = vadd.f32 %v2743, %v3009
        %v3042 = vadd.f32 %v2744, %v3012
        %v3043 = vadd.f32 %v2745, %v3017
        %v3044 = vadd.f32 %v2746, %v3020
        %v3045 = vadd.f32 %v2747, %v3025
        %v3046 = vadd.f32 %v2748, %v3028
        %v3047 = vld [vmem:[%s2] sm:$0x1]
        %v3049 = vlaneseq
        %v3050 = vshrl.u32 %v3049, 7
        %v3051 = vsub.s32 0, %v3050
        %v3052 = vrot.slane %v3047, %v3051
        %v3054 = vadd.f32 %v3031, %v3052
        %v3055 = vadd.f32 %v3032, %v3052
        %v3056 = vadd.f32 %v3033, %v3052
        %v3057 = vadd.f32 %v3034, %v3052
        %v3058 = vadd.f32 %v3035, %v3052
        %v3059 = vadd.f32 %v3036, %v3052
        %v3060 = vadd.f32 %v3037, %v3052
        %v3061 = vadd.f32 %v3038, %v3052
        %v3062 = vadd.f32 %v3039, %v3052
        %v3063 = vadd.f32 %v3040, %v3052
        %v3064 = vadd.f32 %v3041, %v3052
        %v3065 = vadd.f32 %v3042, %v3052
        %v3066 = vadd.f32 %v3043, %v3052
        %v3067 = vadd.f32 %v3044, %v3052
        %v3068 = vadd.f32 %v3045, %v3052
        %v3069 = vadd.f32 %v3046, %v3052
        %v3070 = vxor.u32 %v3054, 2147483648
        %v3071 = vxor.u32 %v3055, 2147483648
        %v3072 = vxor.u32 %v3056, 2147483648
        %v3073 = vxor.u32 %v3057, 2147483648
        %v3074 = vxor.u32 %v3058, 2147483648
        %v3075 = vxor.u32 %v3059, 2147483648
        %v3076 = vxor.u32 %v3060, 2147483648
        %v3077 = vxor.u32 %v3061, 2147483648
        %v3078 = vxor.u32 %v3062, 2147483648
        %v3079 = vxor.u32 %v3063, 2147483648
        %v3080 = vxor.u32 %v3064, 2147483648
        %v3081 = vxor.u32 %v3065, 2147483648
        %v3082 = vxor.u32 %v3066, 2147483648
        %v3083 = vxor.u32 %v3067, 2147483648
        %v3084 = vxor.u32 %v3068, 2147483648
        %v3085 = vxor.u32 %v3069, 2147483648
        %v3086 = vmul.f32 %v3070, 1.442695
        %v3087 = vpow.pop %v3086
        %v3088 = vmul.f32 %v3071, 1.442695
        %v3089 = vpow.pop %v3088
        %v3090 = vmul.f32 %v3072, 1.442695
        %v3091 = vpow.pop %v3090
        %v3092 = vmul.f32 %v3073, 1.442695
        %v3093 = vpow.pop %v3092
        %v3094 = vmul.f32 %v3074, 1.442695
        %v3095 = vpow.pop %v3094
        %v3096 = vmul.f32 %v3075, 1.442695
        %v3097 = vpow.pop %v3096
        %v3098 = vmul.f32 %v3076, 1.442695
        %v3099 = vpow.pop %v3098
        %v3100 = vmul.f32 %v3077, 1.442695
        %v3101 = vpow.pop %v3100
        %v3102 = vmul.f32 %v3078, 1.442695
        %v3103 = vpow.pop %v3102
        %v3104 = vmul.f32 %v3079, 1.442695
        %v3105 = vpow.pop %v3104
        %v3106 = vmul.f32 %v3080, 1.442695
        %v3107 = vpow.pop %v3106
        %v3108 = vmul.f32 %v3081, 1.442695
        %v3109 = vpow.pop %v3108
        %v3110 = vmul.f32 %v3082, 1.442695
        %v3111 = vpow.pop %v3110
        %v3112 = vmul.f32 %v3083, 1.442695
        %v3113 = vpow.pop %v3112
        %v3114 = vmul.f32 %v3084, 1.442695
        %v3115 = vpow.pop %v3114
        %v3116 = vmul.f32 %v3085, 1.442695
        %v3117 = vpow.pop %v3116
        %v3118 = vadd.f32 %v3087, 1.0
        %v3119 = vadd.f32 %v3089, 1.0
        %v3120 = vadd.f32 %v3091, 1.0
        %v3121 = vadd.f32 %v3093, 1.0
        %v3122 = vadd.f32 %v3095, 1.0
        %v3123 = vadd.f32 %v3097, 1.0
        %v3124 = vadd.f32 %v3099, 1.0
        %v3125 = vadd.f32 %v3101, 1.0
        %v3126 = vadd.f32 %v3103, 1.0
        %v3127 = vadd.f32 %v3105, 1.0
        %v3128 = vadd.f32 %v3107, 1.0
        %v3129 = vadd.f32 %v3109, 1.0
        %v3130 = vadd.f32 %v3111, 1.0
        %v3131 = vadd.f32 %v3113, 1.0
        %v3132 = vadd.f32 %v3115, 1.0
        %v3133 = vadd.f32 %v3117, 1.0
        %v3134 = vrcp.pop %v3118
        %v3135 = vmul.f32 1.0, %v3134
        %v3136 = vrcp.pop %v3119
        %v3137 = vmul.f32 1.0, %v3136
        %v3138 = vrcp.pop %v3120
        %v3139 = vmul.f32 1.0, %v3138
        %v3140 = vrcp.pop %v3121
        %v3141 = vmul.f32 1.0, %v3140
        %v3142 = vrcp.pop %v3122
        %v3143 = vmul.f32 1.0, %v3142
        %v3144 = vrcp.pop %v3123
        %v3145 = vmul.f32 1.0, %v3144
        %v3146 = vrcp.pop %v3124
        %v3147 = vmul.f32 1.0, %v3146
        %v3148 = vrcp.pop %v3125
        %v3149 = vmul.f32 1.0, %v3148
        %v3150 = vrcp.pop %v3126
        %v3151 = vmul.f32 1.0, %v3150
        %v3152 = vrcp.pop %v3127
        %v3153 = vmul.f32 1.0, %v3152
        %v3154 = vrcp.pop %v3128
        %v3155 = vmul.f32 1.0, %v3154
        %v3156 = vrcp.pop %v3129
        %v3157 = vmul.f32 1.0, %v3156
        %v3158 = vrcp.pop %v3130
        %v3159 = vmul.f32 1.0, %v3158
        %v3160 = vrcp.pop %v3131
        %v3161 = vmul.f32 1.0, %v3160
        %v3162 = vrcp.pop %v3132
        %v3163 = vmul.f32 1.0, %v3162
        %v3164 = vrcp.pop %v3133
        %v3165 = vmul.f32 1.0, %v3164
        %v3166 = vmul.f32 %v3054, %v3135
        %v3167 = vmul.f32 %v3055, %v3137
        %v3168 = vmul.f32 %v3056, %v3139
        %v3169 = vmul.f32 %v3057, %v3141
        %v3170 = vmul.f32 %v3058, %v3143
        %v3171 = vmul.f32 %v3059, %v3145
        %v3172 = vmul.f32 %v3060, %v3147
        %v3173 = vmul.f32 %v3061, %v3149
        %v3174 = vmul.f32 %v3062, %v3151
        %v3175 = vmul.f32 %v3063, %v3153
        %v3176 = vmul.f32 %v3064, %v3155
        %v3177 = vmul.f32 %v3065, %v3157
        %v3178 = vmul.f32 %v3066, %v3159
        %v3179 = vmul.f32 %v3067, %v3161
        %v3180 = vmul.f32 %v3068, %v3163
        %v3181 = vmul.f32 %v3069, %v3165
        %3182 = vst [vmem:[%s187] sm:$0xff] %v3166
        %3183 = vst [vmem:[%s187 + $0x8] sm:$0xff] %v3167
        %3184 = vst [vmem:[%s187 + $0x10] sm:$0xff] %v3168
        %3185 = vst [vmem:[%s187 + $0x18] sm:$0xff] %v3169
        %3186 = vst [vmem:[%s187 + $0x20] sm:$0xff] %v3170
        %3187 = vst [vmem:[%s187 + $0x28] sm:$0xff] %v3171
        %3188 = vst [vmem:[%s187 + $0x30] sm:$0xff] %v3172
        %3189 = vst [vmem:[%s187 + $0x38] sm:$0xff] %v3173
        %3190 = vst [vmem:[%s187 + $0x40] sm:$0xff] %v3174
        %3191 = vst [vmem:[%s187 + $0x48] sm:$0xff] %v3175
        %3192 = vst [vmem:[%s187 + $0x50] sm:$0xff] %v3176
        %3193 = vst [vmem:[%s187 + $0x58] sm:$0xff] %v3177
        %3194 = vst [vmem:[%s187 + $0x60] sm:$0xff] %v3178
        %3195 = vst [vmem:[%s187 + $0x68] sm:$0xff] %v3179
        %3196 = vst [vmem:[%s187 + $0x70] sm:$0xff] %v3180
        %3197 = vst [vmem:[%s187 + $0x78] sm:$0xff] %v3181
        %s3198 = sand.u32 %s109, 1
        %s3199 = scalar_lea.sflag [#allocation3], %s3198
        %s3200 = sand.u32 %s109, 1
        %s3201 = smul.addr %s3200, 128
        %s3202 = scalar_lea.vmem [#allocation2], %s3201
        // Predicated region
        $region33: #{tpu_custom_call.1} parent=31 // pred_check
          %p3203 = pneg %p119
        $region34: #{tpu_custom_call.1} parent=31 // pred_check_branch
          %3205 = sbr.rel (%p3203) target = $region36
        $region35: #{tpu_custom_call.1} parent=31 // pred_region
          %s3207 = ssub.s32 2048, 2048
          %3208 = vsyncadd %s3199, %s3207
          %s3209 = smul.addr %s22, 16
          %s3210 = smul.addr %s21, 32
          %s3211 = sadd.s32 %s3209, %s3210
          %s3212 = smul.addr %s3211, 128
          %s3213 = scalar_lea.hbm %s3, %s3212
          %s3214 = sshll.u32 %s3202, 4
          %s3215 = int_to_ptr.vmem [resolvable:$true] %s3214
          %3220 = dma.vmem_to_hbm [thread:$0]  %s3215, 2048, %s3213, %s3199, 128, 128, 8
        $region36: #{tpu_custom_call.1} parent=31 // pred_fallthru
          _
      $region32: #{tpu_custom_call.1} parent=5 // pred_fallthru
        _
      %p3221 = scmp.le.s32.totalorder 2, %s12
      // Predicated region
      $region37: #{tpu_custom_call.1} parent=5 // pred_check
        %p3222 = pneg %p3221
      $region38: #{tpu_custom_call.1} parent=5 // pred_check_branch
        %3224 = sbr.rel (%p3222) target = $region40
      $region39: #{tpu_custom_call.1} parent=5 // pred_region
        %s3225 = ssub.s32 %s12, 2
        // Predicated region
        $region41: #{tpu_custom_call.1} parent=39 // pred_check
          %p3226 = pneg %p125
        $region42: #{tpu_custom_call.1} parent=39 // pred_check_branch
          %3228 = sbr.rel (%p3226) target = $region44
        $region43: #{tpu_custom_call.1} parent=39 // pred_region
          %s3229 = sand.u32 %s110, 1
          %s3230 = scalar_lea.sflag [#allocation3], %s3229
          %s3231 = sand.u32 %s110, 1
          %s3232 = smul.addr %s3231, 128
          %s3233 = scalar_lea.vmem [#allocation2], %s3232
          %3234 = dma.done %s3230, 2048
        $region44: #{tpu_custom_call.1} parent=39 // pred_fallthru
          _
      $region40: #{tpu_custom_call.1} parent=5 // pred_fallthru
        _
    $region6: #{tpu_custom_call.1} parent=1 // loop_footer
      %s16 = sadd.s32 1, %s12
    $region7: #{tpu_custom_call.1} parent=1 // loop_footer_branch
      %11 = sbr.rel target = $region3
    $region8: #{tpu_custom_call.1} parent=1 // loop_exit
      _
    %3235 = vsyncpa [#allocation3], 1
    %s3236 = scalar_lea.sflag [#allocation3], 1
    %3237 = vsyncpa %s3236, 1

</llo_original>
